<compile_context>
chip_gen: v5e
topology: v5e:2x2
jax: 0.10.0
libtpu: 0.0.40
codegen_flags: <defaults>
</compile_context>

<pallas_src>
import functools

import jax
import jax.numpy as jnp
from jax.experimental import pallas as pl
from jax.experimental.pallas import tpu as pltpu


def _round_up(n: int, m: int) -> int:
    return ((n + m - 1) // m) * m


def mlp_kernel(x_ref, w1_ref, b1_ref, w2_ref, b2_ref, w3_ref, b3_ref, o_ref):
    x = x_ref[...]                                   # (TILE_B, 2)
    w1 = w1_ref[...]                                 # (2, 10)

    # Layer 1 on the VPU: K=2 is pure latency on the MXU, so do two
    # broadcast-FMAs instead (VALU slots are otherwise idle here).
    h1 = x[:, 0:1] * w1[0:1, :] + x[:, 1:2] * w1[1:2, :] + b1_ref[...]
    h1 = jnp.maximum(h1, 0.0)                        # ReLU, (TILE_B, 10)

    # Layers 2 and 3 on the MXU with tall M.
    h2 = jnp.dot(h1, w2_ref[...], preferred_element_type=jnp.float32) + b2_ref[...]
    h2 = jnp.maximum(h2, 0.0)                        # ReLU, (TILE_B, 20)

    o_ref[...] = (
        jnp.dot(h2, w3_ref[...], preferred_element_type=jnp.float32) + b3_ref[...]
    ).astype(o_ref.dtype)                            # (TILE_B, 4)


def prepare_params(params):
    """One-time preprocessing: transpose weights to (in, out), biases to (1, out)."""
    return (
        params["w1"].T, params["b1"][None, :],
        params["w2"].T, params["b2"][None, :],
        params["w3"].T, params["b3"][None, :],
    )


@functools.partial(jax.jit, static_argnames=("tile_b",))
def mlp_forward(x, prepared, tile_b: int = 512):
    """x: (B, 2) float32.  prepared: output of prepare_params()."""
    w1, b1, w2, b2, w3, b3 = prepared
    B = x.shape[0]
    out_features = w3.shape[1]

    # Pick a tile that is a multiple of 8 rows; don't over-pad tiny batches.
    tile = min(tile_b, _round_up(max(B, 1), 8))
    tile = _round_up(tile, 8)
    b_pad = _round_up(B, tile)
    if b_pad != B:
        x = jnp.pad(x, ((0, b_pad - B), (0, 0)))

    grid = (b_pad // tile,)

    # Resident (non-pipelined) specs for the small weights/biases: index_map
    # always returns block (0, 0), so they are DMA'd once and reused.
    def resident(shape):
        return pl.BlockSpec(shape, lambda i: (0, 0))

    out = pl.pallas_call(
        mlp_kernel,
        out_shape=jax.ShapeDtypeStruct((b_pad, out_features), jnp.float32),
        grid=grid,
        in_specs=[
            pl.BlockSpec((tile, 2), lambda i: (i, 0)),     # x tile
            resident(w1.shape), resident(b1.shape),
            resident(w2.shape), resident(b2.shape),
            resident(w3.shape), resident(b3.shape),
        ],
        out_specs=pl.BlockSpec((tile, out_features), lambda i: (i, 0)),
        compiler_params=pltpu.CompilerParams(
            dimension_semantics=("parallel",),             # megacore on v7x
        ),
    )(x, w1, b1, w2, b2, w3, b3)

    return out[:B]


def init_params(key):
    """Deterministic init matching nn.Linear shapes (uniform +-1/sqrt(fan_in))."""
    def linear(key, fan_in, fan_out):
        kw, kb = jax.random.split(key)
        bound = 1.0 / jnp.sqrt(fan_in)
        w = jax.random.uniform(kw, (fan_out, fan_in), jnp.float32, -bound, bound)
        b = jax.random.uniform(kb, (fan_out,), jnp.float32, -bound, bound)
        return w, b

    k1, k2, k3 = jax.random.split(key, 3)
    w1, b1 = linear(k1, 2, 10)
    w2, b2 = linear(k2, 10, 20)
    w3, b3 = linear(k3, 20, 4)
    return dict(w1=w1, b1=b1, w2=w2, b2=b2, w3=w3, b3=b3)


if __name__ == "__main__":
    key = jax.random.PRNGKey(0)
    k_params, k_x = jax.random.split(key)

    params = init_params(k_params)
    prepared = prepare_params(params)          # done once, outside the hot path

    # Batch chosen to exercise multiple grid steps + ragged-tail padding,
    # while still being tiny (1000 x 2 floats).
    B = 1000
    x = jax.random.normal(k_x, (B, 2), jnp.float32)

    out = mlp_forward(x, prepared, tile_b=512)
    out = jax.block_until_ready(out)

    # Reference check in plain JAX (same math as the PyTorch forward).
    h1 = jnp.maximum(x @ params["w1"].T + params["b1"], 0.0)
    h2 = jnp.maximum(h1 @ params["w2"].T + params["b2"], 0.0)
    ref = h2 @ params["w3"].T + params["b3"]

    assert out.shape == (B, 4)
    assert jnp.allclose(out, ref, atol=1e-5, rtol=1e-5)

    # Also check a tiny batch path (tile shrinks to round_up(B, 8), padded).
    x_small = x[:7]
    out_small = jax.block_until_ready(mlp_forward(x_small, prepared, tile_b=512))
    assert jnp.allclose(out_small, ref[:7], atol=1e-5, rtol=1e-5)

    print("KERNEL_OK")
</pallas_src>

<mosaic_0001>
module attributes {stable_mosaic.version = 11 : i64} {
  func.func @mlp_kernel(%arg0: i32, %arg1: memref<512x2xf32, #tpu.memory_space<vmem>>, %arg2: memref<2x10xf32, #tpu.memory_space<vmem>>, %arg3: memref<1x10xf32, #tpu.memory_space<vmem>>, %arg4: memref<10x20xf32, #tpu.memory_space<vmem>>, %arg5: memref<1x20xf32, #tpu.memory_space<vmem>>, %arg6: memref<20x4xf32, #tpu.memory_space<vmem>>, %arg7: memref<1x4xf32, #tpu.memory_space<vmem>>, %arg8: memref<512x4xf32, #tpu.memory_space<vmem>>) attributes {dimension_semantics = [#tpu.dimension_semantics<parallel>], iteration_bounds = array<i64: 2>, scalar_prefetch = 0 : i64, scratch_operands = 0 : i64, tpu.core_type = #tpu.core_type<tc>, window_params = [{transform_indices = @transform_0, window_bounds = array<i64: 512, 2>}, {pipeline_mode = #tpu.pipeline_mode<synchronous>, transform_indices = @transform_1, window_bounds = array<i64: 2, 10>}, {pipeline_mode = #tpu.pipeline_mode<synchronous>, transform_indices = @transform_2, window_bounds = array<i64: 1, 10>}, {pipeline_mode = #tpu.pipeline_mode<synchronous>, transform_indices = @transform_3, window_bounds = array<i64: 10, 20>}, {pipeline_mode = #tpu.pipeline_mode<synchronous>, transform_indices = @transform_4, window_bounds = array<i64: 1, 20>}, {pipeline_mode = #tpu.pipeline_mode<synchronous>, transform_indices = @transform_5, window_bounds = array<i64: 20, 4>}, {pipeline_mode = #tpu.pipeline_mode<synchronous>, transform_indices = @transform_6, window_bounds = array<i64: 1, 4>}, {transform_indices = @transform_7, window_bounds = array<i64: 512, 4>}]} {
    %c0 = arith.constant 0 : index
    %c0_0 = arith.constant 0 : index
    %0 = vector.load %arg1[%c0, %c0_0] : memref<512x2xf32, #tpu.memory_space<vmem>>, vector<512x2xf32>
    %c0_1 = arith.constant 0 : index
    %c0_2 = arith.constant 0 : index
    %1 = vector.load %arg2[%c0_1, %c0_2] : memref<2x10xf32, #tpu.memory_space<vmem>>, vector<2x10xf32>
    %2 = vector.extract_strided_slice %0 {offsets = [0, 0], sizes = [512, 1], strides = [1, 1]} : vector<512x2xf32> to vector<512x1xf32>
    %3 = vector.extract_strided_slice %1 {offsets = [0, 0], sizes = [1, 10], strides = [1, 1]} : vector<2x10xf32> to vector<1x10xf32>
    %4 = vector.broadcast %2 : vector<512x1xf32> to vector<512x10xf32>
    %5 = vector.broadcast %3 : vector<1x10xf32> to vector<512x10xf32>
    %6 = arith.mulf %4, %5 : vector<512x10xf32>
    %7 = vector.extract_strided_slice %0 {offsets = [0, 1], sizes = [512, 1], strides = [1, 1]} : vector<512x2xf32> to vector<512x1xf32>
    %8 = vector.extract_strided_slice %1 {offsets = [1, 0], sizes = [1, 10], strides = [1, 1]} : vector<2x10xf32> to vector<1x10xf32>
    %9 = vector.broadcast %7 : vector<512x1xf32> to vector<512x10xf32>
    %10 = vector.broadcast %8 : vector<1x10xf32> to vector<512x10xf32>
    %11 = arith.mulf %9, %10 : vector<512x10xf32>
    %12 = arith.addf %6, %11 : vector<512x10xf32>
    %c0_3 = arith.constant 0 : index
    %c0_4 = arith.constant 0 : index
    %13 = vector.load %arg3[%c0_3, %c0_4] : memref<1x10xf32, #tpu.memory_space<vmem>>, vector<1x10xf32>
    %14 = vector.broadcast %13 : vector<1x10xf32> to vector<512x10xf32>
    %15 = arith.addf %12, %14 : vector<512x10xf32>
    %cst = arith.constant 0.000000e+00 : f32
    %16 = vector.broadcast %cst : f32 to vector<512x10xf32>
    %17 = arith.maximumf %15, %16 : vector<512x10xf32>
    %c0_5 = arith.constant 0 : index
    %c0_6 = arith.constant 0 : index
    %18 = vector.load %arg4[%c0_5, %c0_6] : memref<10x20xf32, #tpu.memory_space<vmem>>, vector<10x20xf32>
    %cst_7 = arith.constant dense<0.000000e+00> : vector<512x20xf32>
    %19 = tpu.matmul %17, %18, %cst_7 {dimension_numbers = #tpu.dot_dimension_numbers<[1], [0], [0], [1], [0, 0, 1, 1], [], []>} : vector<512x10xf32>, vector<10x20xf32>, vector<512x20xf32> -> vector<512x20xf32>
    %c0_8 = arith.constant 0 : index
    %c0_9 = arith.constant 0 : index
    %20 = vector.load %arg5[%c0_8, %c0_9] : memref<1x20xf32, #tpu.memory_space<vmem>>, vector<1x20xf32>
    %21 = vector.broadcast %20 : vector<1x20xf32> to vector<512x20xf32>
    %22 = arith.addf %19, %21 : vector<512x20xf32>
    %cst_10 = arith.constant 0.000000e+00 : f32
    %23 = vector.broadcast %cst_10 : f32 to vector<512x20xf32>
    %24 = arith.maximumf %22, %23 : vector<512x20xf32>
    %c0_11 = arith.constant 0 : index
    %c0_12 = arith.constant 0 : index
    %25 = vector.load %arg6[%c0_11, %c0_12] : memref<20x4xf32, #tpu.memory_space<vmem>>, vector<20x4xf32>
    %cst_13 = arith.constant dense<0.000000e+00> : vector<512x4xf32>
    %26 = tpu.matmul %24, %25, %cst_13 {dimension_numbers = #tpu.dot_dimension_numbers<[1], [0], [0], [1], [0, 0, 1, 1], [], []>} : vector<512x20xf32>, vector<20x4xf32>, vector<512x4xf32> -> vector<512x4xf32>
    %c0_14 = arith.constant 0 : index
    %c0_15 = arith.constant 0 : index
    %27 = vector.load %arg7[%c0_14, %c0_15] : memref<1x4xf32, #tpu.memory_space<vmem>>, vector<1x4xf32>
    %28 = vector.broadcast %27 : vector<1x4xf32> to vector<512x4xf32>
    %29 = arith.addf %26, %28 : vector<512x4xf32>
    %c0_16 = arith.constant 0 : index
    %c0_17 = arith.constant 0 : index
    %30 = vector.load %arg8[%c0_16, %c0_17] : memref<512x4xf32, #tpu.memory_space<vmem>>, vector<512x4xf32>
    tpu.vector_store %arg8[%c0_16, %c0_17], %29 {strides = array<i32>} : memref<512x4xf32, #tpu.memory_space<vmem>>, vector<512x4xf32>,
    return
  }
  func.func @transform_0(%arg0: i32) -> (i32, i32) {
    %c0_i32 = arith.constant 0 : i32
    %c0_i32_0 = arith.constant 0 : i32
    return %arg0, %c0_i32 : i32, i32
  }
  func.func @transform_1(%arg0: i32) -> (i32, i32) {
    %c0_i32 = arith.constant 0 : i32
    %c0_i32_0 = arith.constant 0 : i32
    %c0_i32_1 = arith.constant 0 : i32
    return %c0_i32, %c0_i32_0 : i32, i32
  }
  func.func @transform_2(%arg0: i32) -> (i32, i32) {
    %c0_i32 = arith.constant 0 : i32
    %c0_i32_0 = arith.constant 0 : i32
    %c0_i32_1 = arith.constant 0 : i32
    return %c0_i32, %c0_i32_0 : i32, i32
  }
  func.func @transform_3(%arg0: i32) -> (i32, i32) {
    %c0_i32 = arith.constant 0 : i32
    %c0_i32_0 = arith.constant 0 : i32
    %c0_i32_1 = arith.constant 0 : i32
    return %c0_i32, %c0_i32_0 : i32, i32
  }
  func.func @transform_4(%arg0: i32) -> (i32, i32) {
    %c0_i32 = arith.constant 0 : i32
    %c0_i32_0 = arith.constant 0 : i32
    %c0_i32_1 = arith.constant 0 : i32
    return %c0_i32, %c0_i32_0 : i32, i32
  }
  func.func @transform_5(%arg0: i32) -> (i32, i32) {
    %c0_i32 = arith.constant 0 : i32
    %c0_i32_0 = arith.constant 0 : i32
    %c0_i32_1 = arith.constant 0 : i32
    return %c0_i32, %c0_i32_0 : i32, i32
  }
  func.func @transform_6(%arg0: i32) -> (i32, i32) {
    %c0_i32 = arith.constant 0 : i32
    %c0_i32_0 = arith.constant 0 : i32
    %c0_i32_1 = arith.constant 0 : i32
    return %c0_i32, %c0_i32_0 : i32, i32
  }
  func.func @transform_7(%arg0: i32) -> (i32, i32) {
    %c0_i32 = arith.constant 0 : i32
    %c0_i32_0 = arith.constant 0 : i32
    return %arg0, %c0_i32 : i32, i32
  }
}

</mosaic_0001>

<llo_original>
// kernel: mlp_forward.1
$region0: #{mlp_forward.1}
  #allocation0 [shape = 'u32[]', space=smem, size = 0x4, offset = 0x4, fixed_abs, tag = 'smem constant byte address 0x4 - core index']
  #allocation1 [shape = 'u32[72,128]{1,0:T(1,128)}', space=vmem, size = 0x9000, scoped, tag = 'internal scratch']
  %s0 = inlined_call_operand.vmem [shape: f32[1024,2], index: 0, kind: input, shape index: {}]
  %s1 = inlined_call_operand.vmem [shape: f32[2,10], index: 1, kind: input, shape index: {}]
  %s2 = inlined_call_operand.vmem [shape: f32[1,10], index: 2, kind: input, shape index: {}]
  %s3 = inlined_call_operand.vmem [shape: f32[10,20], index: 3, kind: input, shape index: {}]
  %s4 = inlined_call_operand.vmem [shape: f32[1,20], index: 4, kind: input, shape index: {}]
  %s5 = inlined_call_operand.vmem [shape: f32[20,4], index: 5, kind: input, shape index: {}]
  %s6 = inlined_call_operand.vmem [shape: f32[1,4], index: 6, kind: input, shape index: {}]
  %s7 = inlined_call_operand.vmem [shape: f32[1024,4], index: 7, kind: output, shape index: {}]
  %s8 = sld [smem:[#allocation0]]
  $region61: #{mlp_forward.1} parent=0
    _
  %s10 = ssub.s32 1, %s8
  %s11 = scalar_select 0, %s10, %s8
  loop: start=0, step=1, limit=4
  $region2: #{mlp_forward.1} parent=0 // loop_pre_header
    _
  $region3: #{mlp_forward.1} parent=0 // loop_header
    %s13 = sphi 0, %s17
    %p14 = scmp.ge.s32.totalorder %s13, 4
    %s23 = sphi 0, %s25
    %s26 = sphi 0, %s23
    %s27 = sphi 0, %s26
    %s43 = sphi 0, %s27
    %s47 = sphi 0, %s47
    %s49 = sphi 0, %s47
    %s50 = sphi 0, %s49
    %s64 = sphi 0, %s50
    %s68 = sphi 0, %s68
    %s70 = sphi 0, %s68
    %s71 = sphi 0, %s70
    %s85 = sphi 0, %s71
    %s89 = sphi 0, %s89
    %s91 = sphi 0, %s89
    %s92 = sphi 0, %s91
    %s106 = sphi 0, %s92
    %s110 = sphi 0, %s110
    %s112 = sphi 0, %s110
    %s113 = sphi 0, %s112
    %s127 = sphi 0, %s113
    %s131 = sphi 0, %s131
    %s133 = sphi 0, %s131
    %s134 = sphi 0, %s133
    %s148 = sphi 0, %s134
    %s152 = sphi 0, %s152
    %s154 = sphi 0, %s152
    %s155 = sphi 0, %s154
    %s169 = sphi 0, %s155
    %s175 = sphi 0, %s177
    %s178 = sphi 0, %s175
    %s179 = sphi 0, %s178
    %s195 = sphi 0, %s179
  $region4: #{mlp_forward.1} parent=0 // loop_header_branch
    %16 = sbr.rel (%p14) target = $region8
  $region5: #{mlp_forward.1} parent=0 // loop_body
    %s18 = ssub.s32 %s13, 1
    %s19 = ssub.s32 %s13, 2
    %s20 = sadd.s32 %s13, 1
    %s21 = ssub.s32 %s13, %s20
    %p22 = scmp.eq.s32.totalorder %s21, 0
    %s24 = sadd.s32 %s23, 1
    %s25 = scalar_select %p22, %s23, %s24
    %p28 = pneg %p22
    %p29 = scmp.eq.s32.totalorder %s13, 1
    %p30 = por %p28, %p29
    %p31 = scmp.ne.s32.totalorder %s23, %s26
    %p32 = scmp.eq.s32.totalorder %s13, 0
    %p33 = por %p31, %p32
    %p34 = scmp.ne.s32.totalorder %s23, %s26
    %p35 = scmp.eq.s32.totalorder %s18, 1
    %p36 = por %p34, %p35
    %p37 = scmp.ne.s32.totalorder %s26, %s27
    %p38 = scmp.eq.s32.totalorder %s18, 0
    %p39 = por %p37, %p38
    %p40 = scmp.ne.s32.totalorder %s26, %s27
    %p41 = scmp.eq.s32.totalorder %s19, 1
    %p42 = por %p40, %p41
    %p44 = scmp.ne.s32.totalorder %s27, %s43
    %p45 = scmp.eq.s32.totalorder %s19, 0
    %p46 = por %p44, %p45
    %s48 = sadd.s32 %s47, 1
    %p51 = scmp.eq.s32.totalorder %s13, 1
    %p52 = scmp.ne.s32.totalorder %s47, %s49
    %p53 = scmp.eq.s32.totalorder %s13, 0
    %p54 = por %p52, %p53
    %p55 = scmp.ne.s32.totalorder %s47, %s49
    %p56 = scmp.eq.s32.totalorder %s18, 1
    %p57 = por %p55, %p56
    %p58 = scmp.ne.s32.totalorder %s49, %s50
    %p59 = scmp.eq.s32.totalorder %s18, 0
    %p60 = por %p58, %p59
    %p61 = scmp.ne.s32.totalorder %s49, %s50
    %p62 = scmp.eq.s32.totalorder %s19, 1
    %p63 = por %p61, %p62
    %p65 = scmp.ne.s32.totalorder %s50, %s64
    %p66 = scmp.eq.s32.totalorder %s19, 0
    %p67 = por %p65, %p66
    %s69 = sadd.s32 %s68, 1
    %p72 = scmp.eq.s32.totalorder %s13, 1
    %p73 = scmp.ne.s32.totalorder %s68, %s70
    %p74 = scmp.eq.s32.totalorder %s13, 0
    %p75 = por %p73, %p74
    %p76 = scmp.ne.s32.totalorder %s68, %s70
    %p77 = scmp.eq.s32.totalorder %s18, 1
    %p78 = por %p76, %p77
    %p79 = scmp.ne.s32.totalorder %s70, %s71
    %p80 = scmp.eq.s32.totalorder %s18, 0
    %p81 = por %p79, %p80
    %p82 = scmp.ne.s32.totalorder %s70, %s71
    %p83 = scmp.eq.s32.totalorder %s19, 1
    %p84 = por %p82, %p83
    %p86 = scmp.ne.s32.totalorder %s71, %s85
    %p87 = scmp.eq.s32.totalorder %s19, 0
    %p88 = por %p86, %p87
    %s90 = sadd.s32 %s89, 1
    %p93 = scmp.eq.s32.totalorder %s13, 1
    %p94 = scmp.ne.s32.totalorder %s89, %s91
    %p95 = scmp.eq.s32.totalorder %s13, 0
    %p96 = por %p94, %p95
    %p97 = scmp.ne.s32.totalorder %s89, %s91
    %p98 = scmp.eq.s32.totalorder %s18, 1
    %p99 = por %p97, %p98
    %p100 = scmp.ne.s32.totalorder %s91, %s92
    %p101 = scmp.eq.s32.totalorder %s18, 0
    %p102 = por %p100, %p101
    %p103 = scmp.ne.s32.totalorder %s91, %s92
    %p104 = scmp.eq.s32.totalorder %s19, 1
    %p105 = por %p103, %p104
    %p107 = scmp.ne.s32.totalorder %s92, %s106
    %p108 = scmp.eq.s32.totalorder %s19, 0
    %p109 = por %p107, %p108
    %s111 = sadd.s32 %s110, 1
    %p114 = scmp.eq.s32.totalorder %s13, 1
    %p115 = scmp.ne.s32.totalorder %s110, %s112
    %p116 = scmp.eq.s32.totalorder %s13, 0
    %p117 = por %p115, %p116
    %p118 = scmp.ne.s32.totalorder %s110, %s112
    %p119 = scmp.eq.s32.totalorder %s18, 1
    %p120 = por %p118, %p119
    %p121 = scmp.ne.s32.totalorder %s112, %s113
    %p122 = scmp.eq.s32.totalorder %s18, 0
    %p123 = por %p121, %p122
    %p124 = scmp.ne.s32.totalorder %s112, %s113
    %p125 = scmp.eq.s32.totalorder %s19, 1
    %p126 = por %p124, %p125
    %p128 = scmp.ne.s32.totalorder %s113, %s127
    %p129 = scmp.eq.s32.totalorder %s19, 0
    %p130 = por %p128, %p129
    %s132 = sadd.s32 %s131, 1
    %p135 = scmp.eq.s32.totalorder %s13, 1
    %p136 = scmp.ne.s32.totalorder %s131, %s133
    %p137 = scmp.eq.s32.totalorder %s13, 0
    %p138 = por %p136, %p137
    %p139 = scmp.ne.s32.totalorder %s131, %s133
    %p140 = scmp.eq.s32.totalorder %s18, 1
    %p141 = por %p139, %p140
    %p142 = scmp.ne.s32.totalorder %s133, %s134
    %p143 = scmp.eq.s32.totalorder %s18, 0
    %p144 = por %p142, %p143
    %p145 = scmp.ne.s32.totalorder %s133, %s134
    %p146 = scmp.eq.s32.totalorder %s19, 1
    %p147 = por %p145, %p146
    %p149 = scmp.ne.s32.totalorder %s134, %s148
    %p150 = scmp.eq.s32.totalorder %s19, 0
    %p151 = por %p149, %p150
    %s153 = sadd.s32 %s152, 1
    %p156 = scmp.eq.s32.totalorder %s13, 1
    %p157 = scmp.ne.s32.totalorder %s152, %s154
    %p158 = scmp.eq.s32.totalorder %s13, 0
    %p159 = por %p157, %p158
    %p160 = scmp.ne.s32.totalorder %s152, %s154
    %p161 = scmp.eq.s32.totalorder %s18, 1
    %p162 = por %p160, %p161
    %p163 = scmp.ne.s32.totalorder %s154, %s155
    %p164 = scmp.eq.s32.totalorder %s18, 0
    %p165 = por %p163, %p164
    %p166 = scmp.ne.s32.totalorder %s154, %s155
    %p167 = scmp.eq.s32.totalorder %s19, 1
    %p168 = por %p166, %p167
    %p170 = scmp.ne.s32.totalorder %s155, %s169
    %p171 = scmp.eq.s32.totalorder %s19, 0
    %p172 = por %p170, %p171
    %s173 = ssub.s32 %s13, %s20
    %p174 = scmp.eq.s32.totalorder %s173, 0
    %s176 = sadd.s32 %s175, 1
    %s177 = scalar_select %p174, %s175, %s176
    %p180 = pneg %p174
    %p181 = scmp.eq.s32.totalorder %s13, 1
    %p182 = por %p180, %p181
    %p183 = scmp.ne.s32.totalorder %s175, %s178
    %p184 = scmp.eq.s32.totalorder %s13, 0
    %p185 = por %p183, %p184
    %p186 = scmp.ne.s32.totalorder %s175, %s178
    %p187 = scmp.eq.s32.totalorder %s18, 1
    %p188 = por %p186, %p187
    %p189 = scmp.ne.s32.totalorder %s178, %s179
    %p190 = scmp.eq.s32.totalorder %s18, 0
    %p191 = por %p189, %p190
    %p192 = scmp.ne.s32.totalorder %s178, %s179
    %p193 = scmp.eq.s32.totalorder %s19, 1
    %p194 = por %p192, %p193
    %p196 = scmp.ne.s32.totalorder %s179, %s195
    %p197 = scmp.eq.s32.totalorder %s19, 0
    %p198 = por %p196, %p197
    %p199 = scmp.le.s32.totalorder 1, %s13
    %p200 = scmp.lt.s32.totalorder %s13, 3
    %p201 = pnand %p199, %p200
    %p202 = pneg %p201
    // Predicated region
    $region9: #{mlp_forward.1} parent=5 // pred_check
      _
    $region10: #{mlp_forward.1} parent=5 // pred_check_branch
      %204 = sbr.rel (%p201) target = $region12
    $region11: #{mlp_forward.1} parent=5 // pred_region
      %s205 = ssub.s32 %s13, 1
      // Predicated region
      $region13: #{mlp_forward.1} parent=11 // pred_check
        %p206 = pneg %p60
      $region14: #{mlp_forward.1} parent=11 // pred_check_branch
        %208 = sbr.rel (%p206) target = $region16
      $region15: #{mlp_forward.1} parent=11 // pred_region
        _
      $region16: #{mlp_forward.1} parent=11 // pred_fallthru
        _
      // Predicated region
      $region17: #{mlp_forward.1} parent=11 // pred_check
        %p209 = pneg %p81
      $region18: #{mlp_forward.1} parent=11 // pred_check_branch
        %211 = sbr.rel (%p209) target = $region20
      $region19: #{mlp_forward.1} parent=11 // pred_region
        _
      $region20: #{mlp_forward.1} parent=11 // pred_fallthru
        _
      // Predicated region
      $region21: #{mlp_forward.1} parent=11 // pred_check
        %p212 = pneg %p102
      $region22: #{mlp_forward.1} parent=11 // pred_check_branch
        %214 = sbr.rel (%p212) target = $region24
      $region23: #{mlp_forward.1} parent=11 // pred_region
        _
      $region24: #{mlp_forward.1} parent=11 // pred_fallthru
        _
      // Predicated region
      $region25: #{mlp_forward.1} parent=11 // pred_check
        %p215 = pneg %p123
      $region26: #{mlp_forward.1} parent=11 // pred_check_branch
        %217 = sbr.rel (%p215) target = $region28
      $region27: #{mlp_forward.1} parent=11 // pred_region
        _
      $region28: #{mlp_forward.1} parent=11 // pred_fallthru
        _
      // Predicated region
      $region29: #{mlp_forward.1} parent=11 // pred_check
        %p218 = pneg %p144
      $region30: #{mlp_forward.1} parent=11 // pred_check_branch
        %220 = sbr.rel (%p218) target = $region32
      $region31: #{mlp_forward.1} parent=11 // pred_region
        _
      $region32: #{mlp_forward.1} parent=11 // pred_fallthru
        _
      // Predicated region
      $region33: #{mlp_forward.1} parent=11 // pred_check
        %p221 = pneg %p165
      $region34: #{mlp_forward.1} parent=11 // pred_check_branch
        %223 = sbr.rel (%p221) target = $region36
      $region35: #{mlp_forward.1} parent=11 // pred_region
        _
      $region36: #{mlp_forward.1} parent=11 // pred_fallthru
        _
    $region12: #{mlp_forward.1} parent=5 // pred_fallthru
      _
    %p224 = scmp.lt.s32.totalorder %s13, 2
    // Predicated region
    $region37: #{mlp_forward.1} parent=5 // pred_check
      %p225 = pneg %p224
    $region38: #{mlp_forward.1} parent=5 // pred_check_branch
      %227 = sbr.rel (%p225) target = $region40
    $region39: #{mlp_forward.1} parent=5 // pred_region
      // Predicated region
      $region41: #{mlp_forward.1} parent=39 // pred_check
        %p228 = pneg %p33
      $region42: #{mlp_forward.1} parent=39 // pred_check_branch
        %230 = sbr.rel (%p228) target = $region44
      $region43: #{mlp_forward.1} parent=39 // pred_region
        %s231 = smul.u32 64, %s13
        %p232 = scmp.lt.s32.totalorder %s231, 127
        %s233 = scalar_select %p232, %s231, 127
        %s234 = smul.addr %s233, 8
        %s235 = scalar_lea.vmem %s0, %s234
        %s236 = smul.u32 64, %s13
      $region44: #{mlp_forward.1} parent=39 // pred_fallthru
        _
    $region40: #{mlp_forward.1} parent=5 // pred_fallthru
      _
    %p237 = scmp.le.s32.totalorder 1, %s13
    %p238 = scmp.lt.s32.totalorder %s13, 3
    %p239 = pnand %p237, %p238
    %p240 = pneg %p239
    // Predicated region
    $region45: #{mlp_forward.1} parent=5 // pred_check
      _
    $region46: #{mlp_forward.1} parent=5 // pred_check_branch
      %242 = sbr.rel (%p239) target = $region48
    $region47: #{mlp_forward.1} parent=5 // pred_region
      %s243 = ssub.s32 %s13, 1
      %s244 = smul.u32 64, %s18
      %p245 = scmp.lt.s32.totalorder %s244, 127
      %s246 = scalar_select %p245, %s244, 127
      %s247 = smul.addr %s246, 8
      %s248 = scalar_lea.vmem %s0, %s247
      %p249 = pneg %p39
      %p250 = pneg %p36
      %p251 = pneg %p60
      %p252 = pneg %p57
      %p253 = pneg %p81
      %p254 = pneg %p78
      %p255 = pneg %p102
      %p256 = pneg %p99
      %p257 = pneg %p123
      %p258 = pneg %p120
      %p259 = pneg %p144
      %p260 = pneg %p141
      %p261 = pneg %p165
      %p262 = pneg %p162
      %p263 = pneg %p191
      %p264 = pneg %p188
      %s265 = smul.u32 64, %s18
      %p266 = scmp.lt.s32.totalorder %s265, 127
      %s267 = scalar_select %p266, %s265, 127
      %s268 = smul.addr %s267, 8
      %s269 = scalar_lea.vmem %s7, %s268
      %s270 = smul.u32 64, %s18
      %p271 = scmp.lt.s32.totalorder %s270, 127
      %s272 = scalar_select %p271, %s270, 127
      %s273 = smul.addr %s272, 8
      %s274 = scalar_lea.vmem %s0, %s273
      %s275 = smul.u32 64, %s18
      %s276 = smul.u32 64, %s18
      %p277 = scmp.lt.s32.totalorder %s276, 127
      %s278 = scalar_select %p277, %s276, 127
      %s279 = smul.addr %s278, 8
      %s280 = scalar_lea.vmem %s7, %s279
      %s281 = smul.u32 64, %s18
      %v282 = vld [vmem:[%s274] sm:$0xff]
      %v283 = vld [vmem:[%s274 + $0x8] sm:$0xff]
      %v284 = vld [vmem:[%s274 + $0x10] sm:$0xff]
      %v285 = vld [vmem:[%s274 + $0x18] sm:$0xff]
      %v286 = vld [vmem:[%s274 + $0x20] sm:$0xff]
      %v287 = vld [vmem:[%s274 + $0x28] sm:$0xff]
      %v288 = vld [vmem:[%s274 + $0x30] sm:$0xff]
      %v289 = vld [vmem:[%s274 + $0x38] sm:$0xff]
      %v290 = vld [vmem:[%s274 + $0x40] sm:$0xff]
      %v291 = vld [vmem:[%s274 + $0x48] sm:$0xff]
      %v292 = vld [vmem:[%s274 + $0x50] sm:$0xff]
      %v293 = vld [vmem:[%s274 + $0x58] sm:$0xff]
      %v294 = vld [vmem:[%s274 + $0x60] sm:$0xff]
      %v295 = vld [vmem:[%s274 + $0x68] sm:$0xff]
      %v296 = vld [vmem:[%s274 + $0x70] sm:$0xff]
      %v297 = vld [vmem:[%s274 + $0x78] sm:$0xff]
      %v298 = vld [vmem:[%s274 + $0x80] sm:$0xff]
      %v299 = vld [vmem:[%s274 + $0x88] sm:$0xff]
      %v300 = vld [vmem:[%s274 + $0x90] sm:$0xff]
      %v301 = vld [vmem:[%s274 + $0x98] sm:$0xff]
      %v302 = vld [vmem:[%s274 + $0xa0] sm:$0xff]
      %v303 = vld [vmem:[%s274 + $0xa8] sm:$0xff]
      %v304 = vld [vmem:[%s274 + $0xb0] sm:$0xff]
      %v305 = vld [vmem:[%s274 + $0xb8] sm:$0xff]
      %v306 = vld [vmem:[%s274 + $0xc0] sm:$0xff]
      %v307 = vld [vmem:[%s274 + $0xc8] sm:$0xff]
      %v308 = vld [vmem:[%s274 + $0xd0] sm:$0xff]
      %v309 = vld [vmem:[%s274 + $0xd8] sm:$0xff]
      %v310 = vld [vmem:[%s274 + $0xe0] sm:$0xff]
      %v311 = vld [vmem:[%s274 + $0xe8] sm:$0xff]
      %v312 = vld [vmem:[%s274 + $0xf0] sm:$0xff]
      %v313 = vld [vmem:[%s274 + $0xf8] sm:$0xff]
      %v314 = vld [vmem:[%s274 + $0x100] sm:$0xff]
      %v315 = vld [vmem:[%s274 + $0x108] sm:$0xff]
      %v316 = vld [vmem:[%s274 + $0x110] sm:$0xff]
      %v317 = vld [vmem:[%s274 + $0x118] sm:$0xff]
      %v318 = vld [vmem:[%s274 + $0x120] sm:$0xff]
      %v319 = vld [vmem:[%s274 + $0x128] sm:$0xff]
      %v320 = vld [vmem:[%s274 + $0x130] sm:$0xff]
      %v321 = vld [vmem:[%s274 + $0x138] sm:$0xff]
      %v322 = vld [vmem:[%s274 + $0x140] sm:$0xff]
      %v323 = vld [vmem:[%s274 + $0x148] sm:$0xff]
      %v324 = vld [vmem:[%s274 + $0x150] sm:$0xff]
      %v325 = vld [vmem:[%s274 + $0x158] sm:$0xff]
      %v326 = vld [vmem:[%s274 + $0x160] sm:$0xff]
      %v327 = vld [vmem:[%s274 + $0x168] sm:$0xff]
      %v328 = vld [vmem:[%s274 + $0x170] sm:$0xff]
      %v329 = vld [vmem:[%s274 + $0x178] sm:$0xff]
      %v330 = vld [vmem:[%s274 + $0x180] sm:$0xff]
      %v331 = vld [vmem:[%s274 + $0x188] sm:$0xff]
      %v332 = vld [vmem:[%s274 + $0x190] sm:$0xff]
      %v333 = vld [vmem:[%s274 + $0x198] sm:$0xff]
      %v334 = vld [vmem:[%s274 + $0x1a0] sm:$0xff]
      %v335 = vld [vmem:[%s274 + $0x1a8] sm:$0xff]
      %v336 = vld [vmem:[%s274 + $0x1b0] sm:$0xff]
      %v337 = vld [vmem:[%s274 + $0x1b8] sm:$0xff]
      %v338 = vld [vmem:[%s274 + $0x1c0] sm:$0xff]
      %v339 = vld [vmem:[%s274 + $0x1c8] sm:$0xff]
      %v340 = vld [vmem:[%s274 + $0x1d0] sm:$0xff]
      %v341 = vld [vmem:[%s274 + $0x1d8] sm:$0xff]
      %v342 = vld [vmem:[%s274 + $0x1e0] sm:$0xff]
      %v343 = vld [vmem:[%s274 + $0x1e8] sm:$0xff]
      %v344 = vld [vmem:[%s274 + $0x1f0] sm:$0xff]
      %v345 = vld [vmem:[%s274 + $0x1f8] sm:$0xff]
      %v346 = vld [vmem:[%s1] sm:$0x3]
      %348 = vset.pattern.permute.xlu0 0
      %349 = vperm.xlu0 %348, %v282
      %v350 = vpop.permute.xlu0 %349
      %353 = vset.pattern.permute.xlu0 0
      %354 = vperm.xlu0 %353, %v283
      %v355 = vpop.permute.xlu0 %354
      %358 = vset.pattern.permute.xlu0 0
      %359 = vperm.xlu0 %358, %v284
      %v360 = vpop.permute.xlu0 %359
      %363 = vset.pattern.permute.xlu0 0
      %364 = vperm.xlu0 %363, %v285
      %v365 = vpop.permute.xlu0 %364
      %368 = vset.pattern.permute.xlu0 0
      %369 = vperm.xlu0 %368, %v286
      %v370 = vpop.permute.xlu0 %369
      %373 = vset.pattern.permute.xlu0 0
      %374 = vperm.xlu0 %373, %v287
      %v375 = vpop.permute.xlu0 %374
      %378 = vset.pattern.permute.xlu0 0
      %379 = vperm.xlu0 %378, %v288
      %v380 = vpop.permute.xlu0 %379
      %383 = vset.pattern.permute.xlu0 0
      %384 = vperm.xlu0 %383, %v289
      %v385 = vpop.permute.xlu0 %384
      %388 = vset.pattern.permute.xlu0 0
      %389 = vperm.xlu0 %388, %v290
      %v390 = vpop.permute.xlu0 %389
      %393 = vset.pattern.permute.xlu0 0
      %394 = vperm.xlu0 %393, %v291
      %v395 = vpop.permute.xlu0 %394
      %398 = vset.pattern.permute.xlu0 0
      %399 = vperm.xlu0 %398, %v292
      %v400 = vpop.permute.xlu0 %399
      %403 = vset.pattern.permute.xlu0 0
      %404 = vperm.xlu0 %403, %v293
      %v405 = vpop.permute.xlu0 %404
      %408 = vset.pattern.permute.xlu0 0
      %409 = vperm.xlu0 %408, %v294
      %v410 = vpop.permute.xlu0 %409
      %413 = vset.pattern.permute.xlu0 0
      %414 = vperm.xlu0 %413, %v295
      %v415 = vpop.permute.xlu0 %414
      %418 = vset.pattern.permute.xlu0 0
      %419 = vperm.xlu0 %418, %v296
      %v420 = vpop.permute.xlu0 %419
      %423 = vset.pattern.permute.xlu0 0
      %424 = vperm.xlu0 %423, %v297
      %v425 = vpop.permute.xlu0 %424
      %428 = vset.pattern.permute.xlu0 0
      %429 = vperm.xlu0 %428, %v298
      %v430 = vpop.permute.xlu0 %429
      %433 = vset.pattern.permute.xlu0 0
      %434 = vperm.xlu0 %433, %v299
      %v435 = vpop.permute.xlu0 %434
      %438 = vset.pattern.permute.xlu0 0
      %439 = vperm.xlu0 %438, %v300
      %v440 = vpop.permute.xlu0 %439
      %443 = vset.pattern.permute.xlu0 0
      %444 = vperm.xlu0 %443, %v301
      %v445 = vpop.permute.xlu0 %444
      %448 = vset.pattern.permute.xlu0 0
      %449 = vperm.xlu0 %448, %v302
      %v450 = vpop.permute.xlu0 %449
      %453 = vset.pattern.permute.xlu0 0
      %454 = vperm.xlu0 %453, %v303
      %v455 = vpop.permute.xlu0 %454
      %458 = vset.pattern.permute.xlu0 0
      %459 = vperm.xlu0 %458, %v304
      %v460 = vpop.permute.xlu0 %459
      %463 = vset.pattern.permute.xlu0 0
      %464 = vperm.xlu0 %463, %v305
      %v465 = vpop.permute.xlu0 %464
      %468 = vset.pattern.permute.xlu0 0
      %469 = vperm.xlu0 %468, %v306
      %v470 = vpop.permute.xlu0 %469
      %473 = vset.pattern.permute.xlu0 0
      %474 = vperm.xlu0 %473, %v307
      %v475 = vpop.permute.xlu0 %474
      %478 = vset.pattern.permute.xlu0 0
      %479 = vperm.xlu0 %478, %v308
      %v480 = vpop.permute.xlu0 %479
      %483 = vset.pattern.permute.xlu0 0
      %484 = vperm.xlu0 %483, %v309
      %v485 = vpop.permute.xlu0 %484
      %488 = vset.pattern.permute.xlu0 0
      %489 = vperm.xlu0 %488, %v310
      %v490 = vpop.permute.xlu0 %489
      %493 = vset.pattern.permute.xlu0 0
      %494 = vperm.xlu0 %493, %v311
      %v495 = vpop.permute.xlu0 %494
      %498 = vset.pattern.permute.xlu0 0
      %499 = vperm.xlu0 %498, %v312
      %v500 = vpop.permute.xlu0 %499
      %503 = vset.pattern.permute.xlu0 0
      %504 = vperm.xlu0 %503, %v313
      %v505 = vpop.permute.xlu0 %504
      %508 = vset.pattern.permute.xlu0 0
      %509 = vperm.xlu0 %508, %v314
      %v510 = vpop.permute.xlu0 %509
      %513 = vset.pattern.permute.xlu0 0
      %514 = vperm.xlu0 %513, %v315
      %v515 = vpop.permute.xlu0 %514
      %518 = vset.pattern.permute.xlu0 0
      %519 = vperm.xlu0 %518, %v316
      %v520 = vpop.permute.xlu0 %519
      %523 = vset.pattern.permute.xlu0 0
      %524 = vperm.xlu0 %523, %v317
      %v525 = vpop.permute.xlu0 %524
      %528 = vset.pattern.permute.xlu0 0
      %529 = vperm.xlu0 %528, %v318
      %v530 = vpop.permute.xlu0 %529
      %533 = vset.pattern.permute.xlu0 0
      %534 = vperm.xlu0 %533, %v319
      %v535 = vpop.permute.xlu0 %534
      %538 = vset.pattern.permute.xlu0 0
      %539 = vperm.xlu0 %538, %v320
      %v540 = vpop.permute.xlu0 %539
      %543 = vset.pattern.permute.xlu0 0
      %544 = vperm.xlu0 %543, %v321
      %v545 = vpop.permute.xlu0 %544
      %548 = vset.pattern.permute.xlu0 0
      %549 = vperm.xlu0 %548, %v322
      %v550 = vpop.permute.xlu0 %549
      %553 = vset.pattern.permute.xlu0 0
      %554 = vperm.xlu0 %553, %v323
      %v555 = vpop.permute.xlu0 %554
      %558 = vset.pattern.permute.xlu0 0
      %559 = vperm.xlu0 %558, %v324
      %v560 = vpop.permute.xlu0 %559
      %563 = vset.pattern.permute.xlu0 0
      %564 = vperm.xlu0 %563, %v325
      %v565 = vpop.permute.xlu0 %564
      %568 = vset.pattern.permute.xlu0 0
      %569 = vperm.xlu0 %568, %v326
      %v570 = vpop.permute.xlu0 %569
      %573 = vset.pattern.permute.xlu0 0
      %574 = vperm.xlu0 %573, %v327
      %v575 = vpop.permute.xlu0 %574
      %578 = vset.pattern.permute.xlu0 0
      %579 = vperm.xlu0 %578, %v328
      %v580 = vpop.permute.xlu0 %579
      %583 = vset.pattern.permute.xlu0 0
      %584 = vperm.xlu0 %583, %v329
      %v585 = vpop.permute.xlu0 %584
      %588 = vset.pattern.permute.xlu0 0
      %589 = vperm.xlu0 %588, %v330
      %v590 = vpop.permute.xlu0 %589
      %593 = vset.pattern.permute.xlu0 0
      %594 = vperm.xlu0 %593, %v331
      %v595 = vpop.permute.xlu0 %594
      %598 = vset.pattern.permute.xlu0 0
      %599 = vperm.xlu0 %598, %v332
      %v600 = vpop.permute.xlu0 %599
      %603 = vset.pattern.permute.xlu0 0
      %604 = vperm.xlu0 %603, %v333
      %v605 = vpop.permute.xlu0 %604
      %608 = vset.pattern.permute.xlu0 0
      %609 = vperm.xlu0 %608, %v334
      %v610 = vpop.permute.xlu0 %609
      %613 = vset.pattern.permute.xlu0 0
      %614 = vperm.xlu0 %613, %v335
      %v615 = vpop.permute.xlu0 %614
      %618 = vset.pattern.permute.xlu0 0
      %619 = vperm.xlu0 %618, %v336
      %v620 = vpop.permute.xlu0 %619
      %623 = vset.pattern.permute.xlu0 0
      %624 = vperm.xlu0 %623, %v337
      %v625 = vpop.permute.xlu0 %624
      %628 = vset.pattern.permute.xlu0 0
      %629 = vperm.xlu0 %628, %v338
      %v630 = vpop.permute.xlu0 %629
      %633 = vset.pattern.permute.xlu0 0
      %634 = vperm.xlu0 %633, %v339
      %v635 = vpop.permute.xlu0 %634
      %638 = vset.pattern.permute.xlu0 0
      %639 = vperm.xlu0 %638, %v340
      %v640 = vpop.permute.xlu0 %639
      %643 = vset.pattern.permute.xlu0 0
      %644 = vperm.xlu0 %643, %v341
      %v645 = vpop.permute.xlu0 %644
      %648 = vset.pattern.permute.xlu0 0
      %649 = vperm.xlu0 %648, %v342
      %v650 = vpop.permute.xlu0 %649
      %653 = vset.pattern.permute.xlu0 0
      %654 = vperm.xlu0 %653, %v343
      %v655 = vpop.permute.xlu0 %654
      %658 = vset.pattern.permute.xlu0 0
      %659 = vperm.xlu0 %658, %v344
      %v660 = vpop.permute.xlu0 %659
      %663 = vset.pattern.permute.xlu0 0
      %664 = vperm.xlu0 %663, %v345
      %v665 = vpop.permute.xlu0 %664
      %v667 = vperm.slane %v346, 0
      %v668 = vmul.f32 %v350, %v667
      %v669 = vmul.f32 %v355, %v667
      %v670 = vmul.f32 %v360, %v667
      %v671 = vmul.f32 %v365, %v667
      %v672 = vmul.f32 %v370, %v667
      %v673 = vmul.f32 %v375, %v667
      %v674 = vmul.f32 %v380, %v667
      %v675 = vmul.f32 %v385, %v667
      %v676 = vmul.f32 %v390, %v667
      %v677 = vmul.f32 %v395, %v667
      %v678 = vmul.f32 %v400, %v667
      %v679 = vmul.f32 %v405, %v667
      %v680 = vmul.f32 %v410, %v667
      %v681 = vmul.f32 %v415, %v667
      %v682 = vmul.f32 %v420, %v667
      %v683 = vmul.f32 %v425, %v667
      %v684 = vmul.f32 %v430, %v667
      %v685 = vmul.f32 %v435, %v667
      %v686 = vmul.f32 %v440, %v667
      %v687 = vmul.f32 %v445, %v667
      %v688 = vmul.f32 %v450, %v667
      %v689 = vmul.f32 %v455, %v667
      %v690 = vmul.f32 %v460, %v667
      %v691 = vmul.f32 %v465, %v667
      %v692 = vmul.f32 %v470, %v667
      %v693 = vmul.f32 %v475, %v667
      %v694 = vmul.f32 %v480, %v667
      %v695 = vmul.f32 %v485, %v667
      %v696 = vmul.f32 %v490, %v667
      %v697 = vmul.f32 %v495, %v667
      %v698 = vmul.f32 %v500, %v667
      %v699 = vmul.f32 %v505, %v667
      %v700 = vmul.f32 %v510, %v667
      %v701 = vmul.f32 %v515, %v667
      %v702 = vmul.f32 %v520, %v667
      %v703 = vmul.f32 %v525, %v667
      %v704 = vmul.f32 %v530, %v667
      %v705 = vmul.f32 %v535, %v667
      %v706 = vmul.f32 %v540, %v667
      %v707 = vmul.f32 %v545, %v667
      %v708 = vmul.f32 %v550, %v667
      %v709 = vmul.f32 %v555, %v667
      %v710 = vmul.f32 %v560, %v667
      %v711 = vmul.f32 %v565, %v667
      %v712 = vmul.f32 %v570, %v667
      %v713 = vmul.f32 %v575, %v667
      %v714 = vmul.f32 %v580, %v667
      %v715 = vmul.f32 %v585, %v667
      %v716 = vmul.f32 %v590, %v667
      %v717 = vmul.f32 %v595, %v667
      %v718 = vmul.f32 %v600, %v667
      %v719 = vmul.f32 %v605, %v667
      %v720 = vmul.f32 %v610, %v667
      %v721 = vmul.f32 %v615, %v667
      %v722 = vmul.f32 %v620, %v667
      %v723 = vmul.f32 %v625, %v667
      %v724 = vmul.f32 %v630, %v667
      %v725 = vmul.f32 %v635, %v667
      %v726 = vmul.f32 %v640, %v667
      %v727 = vmul.f32 %v645, %v667
      %v728 = vmul.f32 %v650, %v667
      %v729 = vmul.f32 %v655, %v667
      %v730 = vmul.f32 %v660, %v667
      %v731 = vmul.f32 %v665, %v667
      %732 = vset.pattern.permute.xlu0 1
      %733 = vperm.xlu0 %732, %v282
      %v734 = vpop.permute.xlu0 %733
      %736 = vset.pattern.permute.xlu0 1
      %737 = vperm.xlu0 %736, %v283
      %v738 = vpop.permute.xlu0 %737
      %740 = vset.pattern.permute.xlu0 1
      %741 = vperm.xlu0 %740, %v284
      %v742 = vpop.permute.xlu0 %741
      %744 = vset.pattern.permute.xlu0 1
      %745 = vperm.xlu0 %744, %v285
      %v746 = vpop.permute.xlu0 %745
      %748 = vset.pattern.permute.xlu0 1
      %749 = vperm.xlu0 %748, %v286
      %v750 = vpop.permute.xlu0 %749
      %752 = vset.pattern.permute.xlu0 1
      %753 = vperm.xlu0 %752, %v287
      %v754 = vpop.permute.xlu0 %753
      %756 = vset.pattern.permute.xlu0 1
      %757 = vperm.xlu0 %756, %v288
      %v758 = vpop.permute.xlu0 %757
      %760 = vset.pattern.permute.xlu0 1
      %761 = vperm.xlu0 %760, %v289
      %v762 = vpop.permute.xlu0 %761
      %764 = vset.pattern.permute.xlu0 1
      %765 = vperm.xlu0 %764, %v290
      %v766 = vpop.permute.xlu0 %765
      %768 = vset.pattern.permute.xlu0 1
      %769 = vperm.xlu0 %768, %v291
      %v770 = vpop.permute.xlu0 %769
      %772 = vset.pattern.permute.xlu0 1
      %773 = vperm.xlu0 %772, %v292
      %v774 = vpop.permute.xlu0 %773
      %776 = vset.pattern.permute.xlu0 1
      %777 = vperm.xlu0 %776, %v293
      %v778 = vpop.permute.xlu0 %777
      %780 = vset.pattern.permute.xlu0 1
      %781 = vperm.xlu0 %780, %v294
      %v782 = vpop.permute.xlu0 %781
      %784 = vset.pattern.permute.xlu0 1
      %785 = vperm.xlu0 %784, %v295
      %v786 = vpop.permute.xlu0 %785
      %788 = vset.pattern.permute.xlu0 1
      %789 = vperm.xlu0 %788, %v296
      %v790 = vpop.permute.xlu0 %789
      %792 = vset.pattern.permute.xlu0 1
      %793 = vperm.xlu0 %792, %v297
      %v794 = vpop.permute.xlu0 %793
      %796 = vset.pattern.permute.xlu0 1
      %797 = vperm.xlu0 %796, %v298
      %v798 = vpop.permute.xlu0 %797
      %800 = vset.pattern.permute.xlu0 1
      %801 = vperm.xlu0 %800, %v299
      %v802 = vpop.permute.xlu0 %801
      %804 = vset.pattern.permute.xlu0 1
      %805 = vperm.xlu0 %804, %v300
      %v806 = vpop.permute.xlu0 %805
      %808 = vset.pattern.permute.xlu0 1
      %809 = vperm.xlu0 %808, %v301
      %v810 = vpop.permute.xlu0 %809
      %812 = vset.pattern.permute.xlu0 1
      %813 = vperm.xlu0 %812, %v302
      %v814 = vpop.permute.xlu0 %813
      %816 = vset.pattern.permute.xlu0 1
      %817 = vperm.xlu0 %816, %v303
      %v818 = vpop.permute.xlu0 %817
      %820 = vset.pattern.permute.xlu0 1
      %821 = vperm.xlu0 %820, %v304
      %v822 = vpop.permute.xlu0 %821
      %824 = vset.pattern.permute.xlu0 1
      %825 = vperm.xlu0 %824, %v305
      %v826 = vpop.permute.xlu0 %825
      %828 = vset.pattern.permute.xlu0 1
      %829 = vperm.xlu0 %828, %v306
      %v830 = vpop.permute.xlu0 %829
      %832 = vset.pattern.permute.xlu0 1
      %833 = vperm.xlu0 %832, %v307
      %v834 = vpop.permute.xlu0 %833
      %836 = vset.pattern.permute.xlu0 1
      %837 = vperm.xlu0 %836, %v308
      %v838 = vpop.permute.xlu0 %837
      %840 = vset.pattern.permute.xlu0 1
      %841 = vperm.xlu0 %840, %v309
      %v842 = vpop.permute.xlu0 %841
      %844 = vset.pattern.permute.xlu0 1
      %845 = vperm.xlu0 %844, %v310
      %v846 = vpop.permute.xlu0 %845
      %848 = vset.pattern.permute.xlu0 1
      %849 = vperm.xlu0 %848, %v311
      %v850 = vpop.permute.xlu0 %849
      %852 = vset.pattern.permute.xlu0 1
      %853 = vperm.xlu0 %852, %v312
      %v854 = vpop.permute.xlu0 %853
      %856 = vset.pattern.permute.xlu0 1
      %857 = vperm.xlu0 %856, %v313
      %v858 = vpop.permute.xlu0 %857
      %860 = vset.pattern.permute.xlu0 1
      %861 = vperm.xlu0 %860, %v314
      %v862 = vpop.permute.xlu0 %861
      %864 = vset.pattern.permute.xlu0 1
      %865 = vperm.xlu0 %864, %v315
      %v866 = vpop.permute.xlu0 %865
      %868 = vset.pattern.permute.xlu0 1
      %869 = vperm.xlu0 %868, %v316
      %v870 = vpop.permute.xlu0 %869
      %872 = vset.pattern.permute.xlu0 1
      %873 = vperm.xlu0 %872, %v317
      %v874 = vpop.permute.xlu0 %873
      %876 = vset.pattern.permute.xlu0 1
      %877 = vperm.xlu0 %876, %v318
      %v878 = vpop.permute.xlu0 %877
      %880 = vset.pattern.permute.xlu0 1
      %881 = vperm.xlu0 %880, %v319
      %v882 = vpop.permute.xlu0 %881
      %884 = vset.pattern.permute.xlu0 1
      %885 = vperm.xlu0 %884, %v320
      %v886 = vpop.permute.xlu0 %885
      %888 = vset.pattern.permute.xlu0 1
      %889 = vperm.xlu0 %888, %v321
      %v890 = vpop.permute.xlu0 %889
      %892 = vset.pattern.permute.xlu0 1
      %893 = vperm.xlu0 %892, %v322
      %v894 = vpop.permute.xlu0 %893
      %896 = vset.pattern.permute.xlu0 1
      %897 = vperm.xlu0 %896, %v323
      %v898 = vpop.permute.xlu0 %897
      %900 = vset.pattern.permute.xlu0 1
      %901 = vperm.xlu0 %900, %v324
      %v902 = vpop.permute.xlu0 %901
      %904 = vset.pattern.permute.xlu0 1
      %905 = vperm.xlu0 %904, %v325
      %v906 = vpop.permute.xlu0 %905
      %908 = vset.pattern.permute.xlu0 1
      %909 = vperm.xlu0 %908, %v326
      %v910 = vpop.permute.xlu0 %909
      %912 = vset.pattern.permute.xlu0 1
      %913 = vperm.xlu0 %912, %v327
      %v914 = vpop.permute.xlu0 %913
      %916 = vset.pattern.permute.xlu0 1
      %917 = vperm.xlu0 %916, %v328
      %v918 = vpop.permute.xlu0 %917
      %920 = vset.pattern.permute.xlu0 1
      %921 = vperm.xlu0 %920, %v329
      %v922 = vpop.permute.xlu0 %921
      %924 = vset.pattern.permute.xlu0 1
      %925 = vperm.xlu0 %924, %v330
      %v926 = vpop.permute.xlu0 %925
      %928 = vset.pattern.permute.xlu0 1
      %929 = vperm.xlu0 %928, %v331
      %v930 = vpop.permute.xlu0 %929
      %932 = vset.pattern.permute.xlu0 1
      %933 = vperm.xlu0 %932, %v332
      %v934 = vpop.permute.xlu0 %933
      %936 = vset.pattern.permute.xlu0 1
      %937 = vperm.xlu0 %936, %v333
      %v938 = vpop.permute.xlu0 %937
      %940 = vset.pattern.permute.xlu0 1
      %941 = vperm.xlu0 %940, %v334
      %v942 = vpop.permute.xlu0 %941
      %944 = vset.pattern.permute.xlu0 1
      %945 = vperm.xlu0 %944, %v335
      %v946 = vpop.permute.xlu0 %945
      %948 = vset.pattern.permute.xlu0 1
      %949 = vperm.xlu0 %948, %v336
      %v950 = vpop.permute.xlu0 %949
      %952 = vset.pattern.permute.xlu0 1
      %953 = vperm.xlu0 %952, %v337
      %v954 = vpop.permute.xlu0 %953
      %956 = vset.pattern.permute.xlu0 1
      %957 = vperm.xlu0 %956, %v338
      %v958 = vpop.permute.xlu0 %957
      %960 = vset.pattern.permute.xlu0 1
      %961 = vperm.xlu0 %960, %v339
      %v962 = vpop.permute.xlu0 %961
      %964 = vset.pattern.permute.xlu0 1
      %965 = vperm.xlu0 %964, %v340
      %v966 = vpop.permute.xlu0 %965
      %968 = vset.pattern.permute.xlu0 1
      %969 = vperm.xlu0 %968, %v341
      %v970 = vpop.permute.xlu0 %969
      %972 = vset.pattern.permute.xlu0 1
      %973 = vperm.xlu0 %972, %v342
      %v974 = vpop.permute.xlu0 %973
      %976 = vset.pattern.permute.xlu0 1
      %977 = vperm.xlu0 %976, %v343
      %v978 = vpop.permute.xlu0 %977
      %980 = vset.pattern.permute.xlu0 1
      %981 = vperm.xlu0 %980, %v344
      %v982 = vpop.permute.xlu0 %981
      %984 = vset.pattern.permute.xlu0 1
      %985 = vperm.xlu0 %984, %v345
      %v986 = vpop.permute.xlu0 %985
      %v988 = vperm.slane %v346, 1
      %v989 = vmul.f32 %v734, %v988
      %v990 = vmul.f32 %v738, %v988
      %v991 = vmul.f32 %v742, %v988
      %v992 = vmul.f32 %v746, %v988
      %v993 = vmul.f32 %v750, %v988
      %v994 = vmul.f32 %v754, %v988
      %v995 = vmul.f32 %v758, %v988
      %v996 = vmul.f32 %v762, %v988
      %v997 = vmul.f32 %v766, %v988
      %v998 = vmul.f32 %v770, %v988
      %v999 = vmul.f32 %v774, %v988
      %v1000 = vmul.f32 %v778, %v988
      %v1001 = vmul.f32 %v782, %v988
      %v1002 = vmul.f32 %v786, %v988
      %v1003 = vmul.f32 %v790, %v988
      %v1004 = vmul.f32 %v794, %v988
      %v1005 = vmul.f32 %v798, %v988
      %v1006 = vmul.f32 %v802, %v988
      %v1007 = vmul.f32 %v806, %v988
      %v1008 = vmul.f32 %v810, %v988
      %v1009 = vmul.f32 %v814, %v988
      %v1010 = vmul.f32 %v818, %v988
      %v1011 = vmul.f32 %v822, %v988
      %v1012 = vmul.f32 %v826, %v988
      %v1013 = vmul.f32 %v830, %v988
      %v1014 = vmul.f32 %v834, %v988
      %v1015 = vmul.f32 %v838, %v988
      %v1016 = vmul.f32 %v842, %v988
      %v1017 = vmul.f32 %v846, %v988
      %v1018 = vmul.f32 %v850, %v988
      %v1019 = vmul.f32 %v854, %v988
      %v1020 = vmul.f32 %v858, %v988
      %v1021 = vmul.f32 %v862, %v988
      %v1022 = vmul.f32 %v866, %v988
      %v1023 = vmul.f32 %v870, %v988
      %v1024 = vmul.f32 %v874, %v988
      %v1025 = vmul.f32 %v878, %v988
      %v1026 = vmul.f32 %v882, %v988
      %v1027 = vmul.f32 %v886, %v988
      %v1028 = vmul.f32 %v890, %v988
      %v1029 = vmul.f32 %v894, %v988
      %v1030 = vmul.f32 %v898, %v988
      %v1031 = vmul.f32 %v902, %v988
      %v1032 = vmul.f32 %v906, %v988
      %v1033 = vmul.f32 %v910, %v988
      %v1034 = vmul.f32 %v914, %v988
      %v1035 = vmul.f32 %v918, %v988
      %v1036 = vmul.f32 %v922, %v988
      %v1037 = vmul.f32 %v926, %v988
      %v1038 = vmul.f32 %v930, %v988
      %v1039 = vmul.f32 %v934, %v988
      %v1040 = vmul.f32 %v938, %v988
      %v1041 = vmul.f32 %v942, %v988
      %v1042 = vmul.f32 %v946, %v988
      %v1043 = vmul.f32 %v950, %v988
      %v1044 = vmul.f32 %v954, %v988
      %v1045 = vmul.f32 %v958, %v988
      %v1046 = vmul.f32 %v962, %v988
      %v1047 = vmul.f32 %v966, %v988
      %v1048 = vmul.f32 %v970, %v988
      %v1049 = vmul.f32 %v974, %v988
      %v1050 = vmul.f32 %v978, %v988
      %v1051 = vmul.f32 %v982, %v988
      %v1052 = vmul.f32 %v986, %v988
      %v1053 = vadd.f32 %v668, %v989
      %v1054 = vadd.f32 %v669, %v990
      %v1055 = vadd.f32 %v670, %v991
      %v1056 = vadd.f32 %v671, %v992
      %v1057 = vadd.f32 %v672, %v993
      %v1058 = vadd.f32 %v673, %v994
      %v1059 = vadd.f32 %v674, %v995
      %v1060 = vadd.f32 %v675, %v996
      %v1061 = vadd.f32 %v676, %v997
      %v1062 = vadd.f32 %v677, %v998
      %v1063 = vadd.f32 %v678, %v999
      %v1064 = vadd.f32 %v679, %v1000
      %v1065 = vadd.f32 %v680, %v1001
      %v1066 = vadd.f32 %v681, %v1002
      %v1067 = vadd.f32 %v682, %v1003
      %v1068 = vadd.f32 %v683, %v1004
      %v1069 = vadd.f32 %v684, %v1005
      %v1070 = vadd.f32 %v685, %v1006
      %v1071 = vadd.f32 %v686, %v1007
      %v1072 = vadd.f32 %v687, %v1008
      %v1073 = vadd.f32 %v688, %v1009
      %v1074 = vadd.f32 %v689, %v1010
      %v1075 = vadd.f32 %v690, %v1011
      %v1076 = vadd.f32 %v691, %v1012
      %v1077 = vadd.f32 %v692, %v1013
      %v1078 = vadd.f32 %v693, %v1014
      %v1079 = vadd.f32 %v694, %v1015
      %v1080 = vadd.f32 %v695, %v1016
      %v1081 = vadd.f32 %v696, %v1017
      %v1082 = vadd.f32 %v697, %v1018
      %v1083 = vadd.f32 %v698, %v1019
      %v1084 = vadd.f32 %v699, %v1020
      %v1085 = vadd.f32 %v700, %v1021
      %v1086 = vadd.f32 %v701, %v1022
      %v1087 = vadd.f32 %v702, %v1023
      %v1088 = vadd.f32 %v703, %v1024
      %v1089 = vadd.f32 %v704, %v1025
      %v1090 = vadd.f32 %v705, %v1026
      %v1091 = vadd.f32 %v706, %v1027
      %v1092 = vadd.f32 %v707, %v1028
      %v1093 = vadd.f32 %v708, %v1029
      %v1094 = vadd.f32 %v709, %v1030
      %v1095 = vadd.f32 %v710, %v1031
      %v1096 = vadd.f32 %v711, %v1032
      %v1097 = vadd.f32 %v712, %v1033
      %v1098 = vadd.f32 %v713, %v1034
      %v1099 = vadd.f32 %v714, %v1035
      %v1100 = vadd.f32 %v715, %v1036
      %v1101 = vadd.f32 %v716, %v1037
      %v1102 = vadd.f32 %v717, %v1038
      %v1103 = vadd.f32 %v718, %v1039
      %v1104 = vadd.f32 %v719, %v1040
      %v1105 = vadd.f32 %v720, %v1041
      %v1106 = vadd.f32 %v721, %v1042
      %v1107 = vadd.f32 %v722, %v1043
      %v1108 = vadd.f32 %v723, %v1044
      %v1109 = vadd.f32 %v724, %v1045
      %v1110 = vadd.f32 %v725, %v1046
      %v1111 = vadd.f32 %v726, %v1047
      %v1112 = vadd.f32 %v727, %v1048
      %v1113 = vadd.f32 %v728, %v1049
      %v1114 = vadd.f32 %v729, %v1050
      %v1115 = vadd.f32 %v730, %v1051
      %v1116 = vadd.f32 %v731, %v1052
      %v1117 = vld [vmem:[%s2] sm:$0x1]
      %v1119 = vperm.slane %v1117, 0
      %v1121 = vadd.f32 %v1053, %v1119
      %v1122 = vadd.f32 %v1054, %v1119
      %v1123 = vadd.f32 %v1055, %v1119
      %v1124 = vadd.f32 %v1056, %v1119
      %v1125 = vadd.f32 %v1057, %v1119
      %v1126 = vadd.f32 %v1058, %v1119
      %v1127 = vadd.f32 %v1059, %v1119
      %v1128 = vadd.f32 %v1060, %v1119
      %v1129 = vadd.f32 %v1061, %v1119
      %v1130 = vadd.f32 %v1062, %v1119
      %v1131 = vadd.f32 %v1063, %v1119
      %v1132 = vadd.f32 %v1064, %v1119
      %v1133 = vadd.f32 %v1065, %v1119
      %v1134 = vadd.f32 %v1066, %v1119
      %v1135 = vadd.f32 %v1067, %v1119
      %v1136 = vadd.f32 %v1068, %v1119
      %v1137 = vadd.f32 %v1069, %v1119
      %v1138 = vadd.f32 %v1070, %v1119
      %v1139 = vadd.f32 %v1071, %v1119
      %v1140 = vadd.f32 %v1072, %v1119
      %v1141 = vadd.f32 %v1073, %v1119
      %v1142 = vadd.f32 %v1074, %v1119
      %v1143 = vadd.f32 %v1075, %v1119
      %v1144 = vadd.f32 %v1076, %v1119
      %v1145 = vadd.f32 %v1077, %v1119
      %v1146 = vadd.f32 %v1078, %v1119
      %v1147 = vadd.f32 %v1079, %v1119
      %v1148 = vadd.f32 %v1080, %v1119
      %v1149 = vadd.f32 %v1081, %v1119
      %v1150 = vadd.f32 %v1082, %v1119
      %v1151 = vadd.f32 %v1083, %v1119
      %v1152 = vadd.f32 %v1084, %v1119
      %v1153 = vadd.f32 %v1085, %v1119
      %v1154 = vadd.f32 %v1086, %v1119
      %v1155 = vadd.f32 %v1087, %v1119
      %v1156 = vadd.f32 %v1088, %v1119
      %v1157 = vadd.f32 %v1089, %v1119
      %v1158 = vadd.f32 %v1090, %v1119
      %v1159 = vadd.f32 %v1091, %v1119
      %v1160 = vadd.f32 %v1092, %v1119
      %v1161 = vadd.f32 %v1093, %v1119
      %v1162 = vadd.f32 %v1094, %v1119
      %v1163 = vadd.f32 %v1095, %v1119
      %v1164 = vadd.f32 %v1096, %v1119
      %v1165 = vadd.f32 %v1097, %v1119
      %v1166 = vadd.f32 %v1098, %v1119
      %v1167 = vadd.f32 %v1099, %v1119
      %v1168 = vadd.f32 %v1100, %v1119
      %v1169 = vadd.f32 %v1101, %v1119
      %v1170 = vadd.f32 %v1102, %v1119
      %v1171 = vadd.f32 %v1103, %v1119
      %v1172 = vadd.f32 %v1104, %v1119
      %v1173 = vadd.f32 %v1105, %v1119
      %v1174 = vadd.f32 %v1106, %v1119
      %v1175 = vadd.f32 %v1107, %v1119
      %v1176 = vadd.f32 %v1108, %v1119
      %v1177 = vadd.f32 %v1109, %v1119
      %v1178 = vadd.f32 %v1110, %v1119
      %v1179 = vadd.f32 %v1111, %v1119
      %v1180 = vadd.f32 %v1112, %v1119
      %v1181 = vadd.f32 %v1113, %v1119
      %v1182 = vadd.f32 %v1114, %v1119
      %v1183 = vadd.f32 %v1115, %v1119
      %v1184 = vadd.f32 %v1116, %v1119
      %v1185 = vmax.f32 %v1121, 0.0
      %v1186 = vmax.f32 %v1122, 0.0
      %v1187 = vmax.f32 %v1123, 0.0
      %v1188 = vmax.f32 %v1124, 0.0
      %v1189 = vmax.f32 %v1125, 0.0
      %v1190 = vmax.f32 %v1126, 0.0
      %v1191 = vmax.f32 %v1127, 0.0
      %v1192 = vmax.f32 %v1128, 0.0
      %v1193 = vmax.f32 %v1129, 0.0
      %v1194 = vmax.f32 %v1130, 0.0
      %v1195 = vmax.f32 %v1131, 0.0
      %v1196 = vmax.f32 %v1132, 0.0
      %v1197 = vmax.f32 %v1133, 0.0
      %v1198 = vmax.f32 %v1134, 0.0
      %v1199 = vmax.f32 %v1135, 0.0
      %v1200 = vmax.f32 %v1136, 0.0
      %v1201 = vmax.f32 %v1137, 0.0
      %v1202 = vmax.f32 %v1138, 0.0
      %v1203 = vmax.f32 %v1139, 0.0
      %v1204 = vmax.f32 %v1140, 0.0
      %v1205 = vmax.f32 %v1141, 0.0
      %v1206 = vmax.f32 %v1142, 0.0
      %v1207 = vmax.f32 %v1143, 0.0
      %v1208 = vmax.f32 %v1144, 0.0
      %v1209 = vmax.f32 %v1145, 0.0
      %v1210 = vmax.f32 %v1146, 0.0
      %v1211 = vmax.f32 %v1147, 0.0
      %v1212 = vmax.f32 %v1148, 0.0
      %v1213 = vmax.f32 %v1149, 0.0
      %v1214 = vmax.f32 %v1150, 0.0
      %v1215 = vmax.f32 %v1151, 0.0
      %v1216 = vmax.f32 %v1152, 0.0
      %v1217 = vmax.f32 %v1153, 0.0
      %v1218 = vmax.f32 %v1154, 0.0
      %v1219 = vmax.f32 %v1155, 0.0
      %v1220 = vmax.f32 %v1156, 0.0
      %v1221 = vmax.f32 %v1157, 0.0
      %v1222 = vmax.f32 %v1158, 0.0
      %v1223 = vmax.f32 %v1159, 0.0
      %v1224 = vmax.f32 %v1160, 0.0
      %v1225 = vmax.f32 %v1161, 0.0
      %v1226 = vmax.f32 %v1162, 0.0
      %v1227 = vmax.f32 %v1163, 0.0
      %v1228 = vmax.f32 %v1164, 0.0
      %v1229 = vmax.f32 %v1165, 0.0
      %v1230 = vmax.f32 %v1166, 0.0
      %v1231 = vmax.f32 %v1167, 0.0
      %v1232 = vmax.f32 %v1168, 0.0
      %v1233 = vmax.f32 %v1169, 0.0
      %v1234 = vmax.f32 %v1170, 0.0
      %v1235 = vmax.f32 %v1171, 0.0
      %v1236 = vmax.f32 %v1172, 0.0
      %v1237 = vmax.f32 %v1173, 0.0
      %v1238 = vmax.f32 %v1174, 0.0
      %v1239 = vmax.f32 %v1175, 0.0
      %v1240 = vmax.f32 %v1176, 0.0
      %v1241 = vmax.f32 %v1177, 0.0
      %v1242 = vmax.f32 %v1178, 0.0
      %v1243 = vmax.f32 %v1179, 0.0
      %v1244 = vmax.f32 %v1180, 0.0
      %v1245 = vmax.f32 %v1181, 0.0
      %v1246 = vmax.f32 %v1182, 0.0
      %v1247 = vmax.f32 %v1183, 0.0
      %v1248 = vmax.f32 %v1184, 0.0
      %v1249 = vld [vmem:[%s3] sm:$0xff]
      %v1250 = vld [vmem:[%s3 + $0x8] sm:$0x3]
      %v1251 = vld [vmem:[%s4] sm:$0x1]
      %v1253 = vperm.slane %v1251, 0
      %vm1255 = vcmask 80896
      %v1257 = vsel %vm1255, %v1185, 0
      %v1260 = vsel %vm1255, %v1186, 0
      %v1263 = vsel %vm1255, %v1187, 0
      %v1266 = vsel %vm1255, %v1188, 0
      %v1269 = vsel %vm1255, %v1189, 0
      %v1272 = vsel %vm1255, %v1190, 0
      %v1275 = vsel %vm1255, %v1191, 0
      %v1278 = vsel %vm1255, %v1192, 0
      %v1281 = vsel %vm1255, %v1193, 0
      %v1284 = vsel %vm1255, %v1194, 0
      %v1287 = vsel %vm1255, %v1195, 0
      %v1290 = vsel %vm1255, %v1196, 0
      %v1293 = vsel %vm1255, %v1197, 0
      %v1296 = vsel %vm1255, %v1198, 0
      %v1299 = vsel %vm1255, %v1199, 0
      %v1302 = vsel %vm1255, %v1200, 0
      %v1305 = vsel %vm1255, %v1201, 0
      %v1308 = vsel %vm1255, %v1202, 0
      %v1311 = vsel %vm1255, %v1203, 0
      %v1314 = vsel %vm1255, %v1204, 0
      %v1317 = vsel %vm1255, %v1205, 0
      %v1320 = vsel %vm1255, %v1206, 0
      %v1323 = vsel %vm1255, %v1207, 0
      %v1326 = vsel %vm1255, %v1208, 0
      %v1329 = vsel %vm1255, %v1209, 0
      %v1332 = vsel %vm1255, %v1210, 0
      %v1335 = vsel %vm1255, %v1211, 0
      %v1338 = vsel %vm1255, %v1212, 0
      %v1341 = vsel %vm1255, %v1213, 0
      %v1344 = vsel %vm1255, %v1214, 0
      %v1347 = vsel %vm1255, %v1215, 0
      %v1350 = vsel %vm1255, %v1216, 0
      %v1353 = vsel %vm1255, %v1217, 0
      %v1356 = vsel %vm1255, %v1218, 0
      %v1359 = vsel %vm1255, %v1219, 0
      %v1362 = vsel %vm1255, %v1220, 0
      %v1365 = vsel %vm1255, %v1221, 0
      %v1368 = vsel %vm1255, %v1222, 0
      %v1371 = vsel %vm1255, %v1223, 0
      %v1374 = vsel %vm1255, %v1224, 0
      %v1377 = vsel %vm1255, %v1225, 0
      %v1380 = vsel %vm1255, %v1226, 0
      %v1383 = vsel %vm1255, %v1227, 0
      %v1386 = vsel %vm1255, %v1228, 0
      %v1389 = vsel %vm1255, %v1229, 0
      %v1392 = vsel %vm1255, %v1230, 0
      %v1395 = vsel %vm1255, %v1231, 0
      %v1398 = vsel %vm1255, %v1232, 0
      %v1401 = vsel %vm1255, %v1233, 0
      %v1404 = vsel %vm1255, %v1234, 0
      %v1407 = vsel %vm1255, %v1235, 0
      %v1410 = vsel %vm1255, %v1236, 0
      %v1413 = vsel %vm1255, %v1237, 0
      %v1416 = vsel %vm1255, %v1238, 0
      %v1419 = vsel %vm1255, %v1239, 0
      %v1422 = vsel %vm1255, %v1240, 0
      %v1425 = vsel %vm1255, %v1241, 0
      %v1428 = vsel %vm1255, %v1242, 0
      %v1431 = vsel %vm1255, %v1243, 0
      %v1434 = vsel %vm1255, %v1244, 0
      %v1437 = vsel %vm1255, %v1245, 0
      %v1440 = vsel %vm1255, %v1246, 0
      %v1443 = vsel %vm1255, %v1247, 0
      %v1446 = vsel %vm1255, %v1248, 0
      %vm1448 = vcmask 1041408
      %v1450 = vsel %vm1448, %v1250, 0
      %1452 = vmatpush.msra.mxu0 0.0
      %1453 = vmatpush.msra.mxu0 0.0
      %1454 = vmatpush.msra.mxu0 0.0
      %1455 = vmatpush.msra.mxu0 0.0
      %1456 = vmatpush.msra.mxu0 0.0
      %1457 = vmatpush.msra.mxu0 0.0
      %1458 = vmatpush.msra.mxu0 0.0
      %1459 = vmatpush.msra.mxu0 0.0
      %1460 = vmatpush.msra.mxu0 0.0
      %1461 = vmatpush.msra.mxu0 0.0
      %1462 = vmatpush.msra.mxu0 0.0
      %1463 = vmatpush.msra.mxu0 0.0
      %1464 = vmatpush.msra.mxu0 0.0
      %1465 = vmatpush.msra.mxu0 0.0
      %1466 = vmatpush.msra.mxu0 %v1450
      %1467 = vmatpush.msra.mxu0 %v1249
      %1468 = vmatmul.f32.gmra.mxu0 %v1257
      %v1469 = vpop.f32.mrf.mxu0
      %v1470 = vadd.f32 %v1253, %v1469
      %1471 = vmatmul.f32.gmra.mxu0 %v1260
      %v1472 = vpop.f32.mrf.mxu0
      %v1473 = vadd.f32 %v1253, %v1472
      %1474 = vmatmul.f32.gmra.mxu0 %v1263
      %v1475 = vpop.f32.mrf.mxu0
      %v1476 = vadd.f32 %v1253, %v1475
      %1477 = vmatmul.f32.gmra.mxu0 %v1266
      %v1478 = vpop.f32.mrf.mxu0
      %v1479 = vadd.f32 %v1253, %v1478
      %1480 = vmatmul.f32.gmra.mxu0 %v1269
      %v1481 = vpop.f32.mrf.mxu0
      %v1482 = vadd.f32 %v1253, %v1481
      %1483 = vmatmul.f32.gmra.mxu0 %v1272
      %v1484 = vpop.f32.mrf.mxu0
      %v1485 = vadd.f32 %v1253, %v1484
      %1486 = vmatmul.f32.gmra.mxu0 %v1275
      %v1487 = vpop.f32.mrf.mxu0
      %v1488 = vadd.f32 %v1253, %v1487
      %1489 = vmatmul.f32.gmra.mxu0 %v1278
      %v1490 = vpop.f32.mrf.mxu0
      %v1491 = vadd.f32 %v1253, %v1490
      %1492 = vmatmul.f32.gmra.mxu0 %v1281
      %v1493 = vpop.f32.mrf.mxu0
      %v1494 = vadd.f32 %v1253, %v1493
      %1495 = vmatmul.f32.gmra.mxu0 %v1284
      %v1496 = vpop.f32.mrf.mxu0
      %v1497 = vadd.f32 %v1253, %v1496
      %1498 = vmatmul.f32.gmra.mxu0 %v1287
      %v1499 = vpop.f32.mrf.mxu0
      %v1500 = vadd.f32 %v1253, %v1499
      %1501 = vmatmul.f32.gmra.mxu0 %v1290
      %v1502 = vpop.f32.mrf.mxu0
      %v1503 = vadd.f32 %v1253, %v1502
      %1504 = vmatmul.f32.gmra.mxu0 %v1293
      %v1505 = vpop.f32.mrf.mxu0
      %v1506 = vadd.f32 %v1253, %v1505
      %1507 = vmatmul.f32.gmra.mxu0 %v1296
      %v1508 = vpop.f32.mrf.mxu0
      %v1509 = vadd.f32 %v1253, %v1508
      %1510 = vmatmul.f32.gmra.mxu0 %v1299
      %v1511 = vpop.f32.mrf.mxu0
      %v1512 = vadd.f32 %v1253, %v1511
      %1513 = vmatmul.f32.gmra.mxu0 %v1302
      %v1514 = vpop.f32.mrf.mxu0
      %v1515 = vadd.f32 %v1253, %v1514
      %1516 = vmatmul.f32.gmra.mxu0 %v1305
      %v1517 = vpop.f32.mrf.mxu0
      %v1518 = vadd.f32 %v1253, %v1517
      %1519 = vmatmul.f32.gmra.mxu0 %v1308
      %v1520 = vpop.f32.mrf.mxu0
      %v1521 = vadd.f32 %v1253, %v1520
      %1522 = vmatmul.f32.gmra.mxu0 %v1311
      %v1523 = vpop.f32.mrf.mxu0
      %v1524 = vadd.f32 %v1253, %v1523
      %1525 = vmatmul.f32.gmra.mxu0 %v1314
      %v1526 = vpop.f32.mrf.mxu0
      %v1527 = vadd.f32 %v1253, %v1526
      %1528 = vmatmul.f32.gmra.mxu0 %v1317
      %v1529 = vpop.f32.mrf.mxu0
      %v1530 = vadd.f32 %v1253, %v1529
      %1531 = vmatmul.f32.gmra.mxu0 %v1320
      %v1532 = vpop.f32.mrf.mxu0
      %v1533 = vadd.f32 %v1253, %v1532
      %1534 = vmatmul.f32.gmra.mxu0 %v1323
      %v1535 = vpop.f32.mrf.mxu0
      %v1536 = vadd.f32 %v1253, %v1535
      %1537 = vmatmul.f32.gmra.mxu0 %v1326
      %v1538 = vpop.f32.mrf.mxu0
      %v1539 = vadd.f32 %v1253, %v1538
      %1540 = vmatmul.f32.gmra.mxu0 %v1329
      %v1541 = vpop.f32.mrf.mxu0
      %v1542 = vadd.f32 %v1253, %v1541
      %1543 = vmatmul.f32.gmra.mxu0 %v1332
      %v1544 = vpop.f32.mrf.mxu0
      %v1545 = vadd.f32 %v1253, %v1544
      %1546 = vmatmul.f32.gmra.mxu0 %v1335
      %v1547 = vpop.f32.mrf.mxu0
      %v1548 = vadd.f32 %v1253, %v1547
      %1549 = vmatmul.f32.gmra.mxu0 %v1338
      %v1550 = vpop.f32.mrf.mxu0
      %v1551 = vadd.f32 %v1253, %v1550
      %1552 = vmatmul.f32.gmra.mxu0 %v1341
      %v1553 = vpop.f32.mrf.mxu0
      %v1554 = vadd.f32 %v1253, %v1553
      %1555 = vmatmul.f32.gmra.mxu0 %v1344
      %v1556 = vpop.f32.mrf.mxu0
      %v1557 = vadd.f32 %v1253, %v1556
      %1558 = vmatmul.f32.gmra.mxu0 %v1347
      %v1559 = vpop.f32.mrf.mxu0
      %v1560 = vadd.f32 %v1253, %v1559
      %1561 = vmatmul.f32.gmra.mxu0 %v1350
      %v1562 = vpop.f32.mrf.mxu0
      %v1563 = vadd.f32 %v1253, %v1562
      %1564 = vmatmul.f32.gmra.mxu0 %v1353
      %v1565 = vpop.f32.mrf.mxu0
      %v1566 = vadd.f32 %v1253, %v1565
      %1567 = vmatmul.f32.gmra.mxu0 %v1356
      %v1568 = vpop.f32.mrf.mxu0
      %v1569 = vadd.f32 %v1253, %v1568
      %1570 = vmatmul.f32.gmra.mxu0 %v1359
      %v1571 = vpop.f32.mrf.mxu0
      %v1572 = vadd.f32 %v1253, %v1571
      %1573 = vmatmul.f32.gmra.mxu0 %v1362
      %v1574 = vpop.f32.mrf.mxu0
      %v1575 = vadd.f32 %v1253, %v1574
      %1576 = vmatmul.f32.gmra.mxu0 %v1365
      %v1577 = vpop.f32.mrf.mxu0
      %v1578 = vadd.f32 %v1253, %v1577
      %1579 = vmatmul.f32.gmra.mxu0 %v1368
      %v1580 = vpop.f32.mrf.mxu0
      %v1581 = vadd.f32 %v1253, %v1580
      %1582 = vmatmul.f32.gmra.mxu0 %v1371
      %v1583 = vpop.f32.mrf.mxu0
      %v1584 = vadd.f32 %v1253, %v1583
      %1585 = vmatmul.f32.gmra.mxu0 %v1374
      %v1586 = vpop.f32.mrf.mxu0
      %v1587 = vadd.f32 %v1253, %v1586
      %1588 = vmatmul.f32.gmra.mxu0 %v1377
      %v1589 = vpop.f32.mrf.mxu0
      %v1590 = vadd.f32 %v1253, %v1589
      %1591 = vmatmul.f32.gmra.mxu0 %v1380
      %v1592 = vpop.f32.mrf.mxu0
      %v1593 = vadd.f32 %v1253, %v1592
      %1594 = vmatmul.f32.gmra.mxu0 %v1383
      %v1595 = vpop.f32.mrf.mxu0
      %v1596 = vadd.f32 %v1253, %v1595
      %1597 = vmatmul.f32.gmra.mxu0 %v1386
      %v1598 = vpop.f32.mrf.mxu0
      %v1599 = vadd.f32 %v1253, %v1598
      %1600 = vmatmul.f32.gmra.mxu0 %v1389
      %v1601 = vpop.f32.mrf.mxu0
      %v1602 = vadd.f32 %v1253, %v1601
      %1603 = vmatmul.f32.gmra.mxu0 %v1392
      %v1604 = vpop.f32.mrf.mxu0
      %v1605 = vadd.f32 %v1253, %v1604
      %1606 = vmatmul.f32.gmra.mxu0 %v1395
      %v1607 = vpop.f32.mrf.mxu0
      %v1608 = vadd.f32 %v1253, %v1607
      %1609 = vmatmul.f32.gmra.mxu0 %v1398
      %v1610 = vpop.f32.mrf.mxu0
      %v1611 = vadd.f32 %v1253, %v1610
      %1612 = vmatmul.f32.gmra.mxu0 %v1401
      %v1613 = vpop.f32.mrf.mxu0
      %v1614 = vadd.f32 %v1253, %v1613
      %1615 = vmatmul.f32.gmra.mxu0 %v1404
      %v1616 = vpop.f32.mrf.mxu0
      %v1617 = vadd.f32 %v1253, %v1616
      %1618 = vmatmul.f32.gmra.mxu0 %v1407
      %v1619 = vpop.f32.mrf.mxu0
      %v1620 = vadd.f32 %v1253, %v1619
      %1621 = vmatmul.f32.gmra.mxu0 %v1410
      %v1622 = vpop.f32.mrf.mxu0
      %v1623 = vadd.f32 %v1253, %v1622
      %1624 = vmatmul.f32.gmra.mxu0 %v1413
      %v1625 = vpop.f32.mrf.mxu0
      %v1626 = vadd.f32 %v1253, %v1625
      %1627 = vmatmul.f32.gmra.mxu0 %v1416
      %v1628 = vpop.f32.mrf.mxu0
      %v1629 = vadd.f32 %v1253, %v1628
      %1630 = vmatmul.f32.gmra.mxu0 %v1419
      %v1631 = vpop.f32.mrf.mxu0
      %v1632 = vadd.f32 %v1253, %v1631
      %1633 = vmatmul.f32.gmra.mxu0 %v1422
      %v1634 = vpop.f32.mrf.mxu0
      %v1635 = vadd.f32 %v1253, %v1634
      %1636 = vmatmul.f32.gmra.mxu0 %v1425
      %v1637 = vpop.f32.mrf.mxu0
      %v1638 = vadd.f32 %v1253, %v1637
      %1639 = vmatmul.f32.gmra.mxu0 %v1428
      %v1640 = vpop.f32.mrf.mxu0
      %v1641 = vadd.f32 %v1253, %v1640
      %1642 = vmatmul.f32.gmra.mxu0 %v1431
      %v1643 = vpop.f32.mrf.mxu0
      %v1644 = vadd.f32 %v1253, %v1643
      %1645 = vmatmul.f32.gmra.mxu0 %v1434
      %v1646 = vpop.f32.mrf.mxu0
      %v1647 = vadd.f32 %v1253, %v1646
      %1648 = vmatmul.f32.gmra.mxu0 %v1437
      %v1649 = vpop.f32.mrf.mxu0
      %v1650 = vadd.f32 %v1253, %v1649
      %1651 = vmatmul.f32.gmra.mxu0 %v1440
      %v1652 = vpop.f32.mrf.mxu0
      %v1653 = vadd.f32 %v1253, %v1652
      %1654 = vmatmul.f32.gmra.mxu0 %v1443
      %v1655 = vpop.f32.mrf.mxu0
      %v1656 = vadd.f32 %v1253, %v1655
      %1657 = vmatmul.f32.gmra.mxu0 %v1446
      %v1658 = vpop.f32.mrf.mxu0
      %v1659 = vadd.f32 %v1253, %v1658
      %1660 = vdwg.mxu0
      %v1661 = vmax.f32 %v1470, 0.0
      %v1662 = vmax.f32 %v1473, 0.0
      %v1663 = vmax.f32 %v1476, 0.0
      %v1664 = vmax.f32 %v1479, 0.0
      %v1665 = vmax.f32 %v1482, 0.0
      %v1666 = vmax.f32 %v1485, 0.0
      %v1667 = vmax.f32 %v1488, 0.0
      %v1668 = vmax.f32 %v1491, 0.0
      %v1669 = vmax.f32 %v1494, 0.0
      %v1670 = vmax.f32 %v1497, 0.0
      %v1671 = vmax.f32 %v1500, 0.0
      %v1672 = vmax.f32 %v1503, 0.0
      %v1673 = vmax.f32 %v1506, 0.0
      %v1674 = vmax.f32 %v1509, 0.0
      %v1675 = vmax.f32 %v1512, 0.0
      %v1676 = vmax.f32 %v1515, 0.0
      %v1677 = vmax.f32 %v1518, 0.0
      %v1678 = vmax.f32 %v1521, 0.0
      %v1679 = vmax.f32 %v1524, 0.0
      %v1680 = vmax.f32 %v1527, 0.0
      %v1681 = vmax.f32 %v1530, 0.0
      %v1682 = vmax.f32 %v1533, 0.0
      %v1683 = vmax.f32 %v1536, 0.0
      %v1684 = vmax.f32 %v1539, 0.0
      %v1685 = vmax.f32 %v1542, 0.0
      %v1686 = vmax.f32 %v1545, 0.0
      %v1687 = vmax.f32 %v1548, 0.0
      %v1688 = vmax.f32 %v1551, 0.0
      %v1689 = vmax.f32 %v1554, 0.0
      %v1690 = vmax.f32 %v1557, 0.0
      %v1691 = vmax.f32 %v1560, 0.0
      %v1692 = vmax.f32 %v1563, 0.0
      %v1693 = vmax.f32 %v1566, 0.0
      %v1694 = vmax.f32 %v1569, 0.0
      %v1695 = vmax.f32 %v1572, 0.0
      %v1696 = vmax.f32 %v1575, 0.0
      %v1697 = vmax.f32 %v1578, 0.0
      %v1698 = vmax.f32 %v1581, 0.0
      %v1699 = vmax.f32 %v1584, 0.0
      %v1700 = vmax.f32 %v1587, 0.0
      %v1701 = vmax.f32 %v1590, 0.0
      %v1702 = vmax.f32 %v1593, 0.0
      %v1703 = vmax.f32 %v1596, 0.0
      %v1704 = vmax.f32 %v1599, 0.0
      %v1705 = vmax.f32 %v1602, 0.0
      %v1706 = vmax.f32 %v1605, 0.0
      %v1707 = vmax.f32 %v1608, 0.0
      %v1708 = vmax.f32 %v1611, 0.0
      %v1709 = vmax.f32 %v1614, 0.0
      %v1710 = vmax.f32 %v1617, 0.0
      %v1711 = vmax.f32 %v1620, 0.0
      %v1712 = vmax.f32 %v1623, 0.0
      %v1713 = vmax.f32 %v1626, 0.0
      %v1714 = vmax.f32 %v1629, 0.0
      %v1715 = vmax.f32 %v1632, 0.0
      %v1716 = vmax.f32 %v1635, 0.0
      %v1717 = vmax.f32 %v1638, 0.0
      %v1718 = vmax.f32 %v1641, 0.0
      %v1719 = vmax.f32 %v1644, 0.0
      %v1720 = vmax.f32 %v1647, 0.0
      %v1721 = vmax.f32 %v1650, 0.0
      %v1722 = vmax.f32 %v1653, 0.0
      %v1723 = vmax.f32 %v1656, 0.0
      %v1724 = vmax.f32 %v1659, 0.0
      %v1725 = vld [vmem:[%s5] sm:$0xff]
      %v1726 = vld [vmem:[%s5 + $0x8] sm:$0xff]
      %v1727 = vld [vmem:[%s5 + $0x10] sm:$0xf]
      %v1728 = vld [vmem:[%s6] sm:$0x1]
      %v1730 = vperm.slane %v1728, 0
      %vm1732 = vcmask 162816
      %v1734 = vsel %vm1732, %v1661, 0
      %v1737 = vsel %vm1732, %v1662, 0
      %v1740 = vsel %vm1732, %v1663, 0
      %v1743 = vsel %vm1732, %v1664, 0
      %v1746 = vsel %vm1732, %v1665, 0
      %v1749 = vsel %vm1732, %v1666, 0
      %v1752 = vsel %vm1732, %v1667, 0
      %v1755 = vsel %vm1732, %v1668, 0
      %v1758 = vsel %vm1732, %v1669, 0
      %v1761 = vsel %vm1732, %v1670, 0
      %v1764 = vsel %vm1732, %v1671, 0
      %v1767 = vsel %vm1732, %v1672, 0
      %v1770 = vsel %vm1732, %v1673, 0
      %v1773 = vsel %vm1732, %v1674, 0
      %v1776 = vsel %vm1732, %v1675, 0
      %v1779 = vsel %vm1732, %v1676, 0
      %v1782 = vsel %vm1732, %v1677, 0
      %v1785 = vsel %vm1732, %v1678, 0
      %v1788 = vsel %vm1732, %v1679, 0
      %v1791 = vsel %vm1732, %v1680, 0
      %v1794 = vsel %vm1732, %v1681, 0
      %v1797 = vsel %vm1732, %v1682, 0
      %v1800 = vsel %vm1732, %v1683, 0
      %v1803 = vsel %vm1732, %v1684, 0
      %v1806 = vsel %vm1732, %v1685, 0
      %v1809 = vsel %vm1732, %v1686, 0
      %v1812 = vsel %vm1732, %v1687, 0
      %v1815 = vsel %vm1732, %v1688, 0
      %v1818 = vsel %vm1732, %v1689, 0
      %v1821 = vsel %vm1732, %v1690, 0
      %v1824 = vsel %vm1732, %v1691, 0
      %v1827 = vsel %vm1732, %v1692, 0
      %v1830 = vsel %vm1732, %v1693, 0
      %v1833 = vsel %vm1732, %v1694, 0
      %v1836 = vsel %vm1732, %v1695, 0
      %v1839 = vsel %vm1732, %v1696, 0
      %v1842 = vsel %vm1732, %v1697, 0
      %v1845 = vsel %vm1732, %v1698, 0
      %v1848 = vsel %vm1732, %v1699, 0
      %v1851 = vsel %vm1732, %v1700, 0
      %v1854 = vsel %vm1732, %v1701, 0
      %v1857 = vsel %vm1732, %v1702, 0
      %v1860 = vsel %vm1732, %v1703, 0
      %v1863 = vsel %vm1732, %v1704, 0
      %v1866 = vsel %vm1732, %v1705, 0
      %v1869 = vsel %vm1732, %v1706, 0
      %v1872 = vsel %vm1732, %v1707, 0
      %v1875 = vsel %vm1732, %v1708, 0
      %v1878 = vsel %vm1732, %v1709, 0
      %v1881 = vsel %vm1732, %v1710, 0
      %v1884 = vsel %vm1732, %v1711, 0
      %v1887 = vsel %vm1732, %v1712, 0
      %v1890 = vsel %vm1732, %v1713, 0
      %v1893 = vsel %vm1732, %v1714, 0
      %v1896 = vsel %vm1732, %v1715, 0
      %v1899 = vsel %vm1732, %v1716, 0
      %v1902 = vsel %vm1732, %v1717, 0
      %v1905 = vsel %vm1732, %v1718, 0
      %v1908 = vsel %vm1732, %v1719, 0
      %v1911 = vsel %vm1732, %v1720, 0
      %v1914 = vsel %vm1732, %v1721, 0
      %v1917 = vsel %vm1732, %v1722, 0
      %v1920 = vsel %vm1732, %v1723, 0
      %v1923 = vsel %vm1732, %v1724, 0
      %vm1925 = vcmask 1043456
      %v1927 = vsel %vm1925, %v1727, 0
      %1929 = vmatpush.msra.mxu0 0.0
      %1930 = vmatpush.msra.mxu0 0.0
      %1931 = vmatpush.msra.mxu0 0.0
      %1932 = vmatpush.msra.mxu0 0.0
      %1933 = vmatpush.msra.mxu0 0.0
      %1934 = vmatpush.msra.mxu0 0.0
      %1935 = vmatpush.msra.mxu0 0.0
      %1936 = vmatpush.msra.mxu0 0.0
      %1937 = vmatpush.msra.mxu0 0.0
      %1938 = vmatpush.msra.mxu0 0.0
      %1939 = vmatpush.msra.mxu0 0.0
      %1940 = vmatpush.msra.mxu0 0.0
      %1941 = vmatpush.msra.mxu0 0.0
      %1942 = vmatpush.msra.mxu0 %v1927
      %1943 = vmatpush.msra.mxu0 %v1726
      %1944 = vmatpush.msra.mxu0 %v1725
      %1945 = vmatmul.f32.gmra.mxu0 %v1734
      %v1946 = vpop.f32.mrf.mxu0
      %v1947 = vadd.f32 %v1730, %v1946
      %1948 = vmatmul.f32.gmra.mxu0 %v1737
      %v1949 = vpop.f32.mrf.mxu0
      %v1950 = vadd.f32 %v1730, %v1949
      %1951 = vmatmul.f32.gmra.mxu0 %v1740
      %v1952 = vpop.f32.mrf.mxu0
      %v1953 = vadd.f32 %v1730, %v1952
      %1954 = vmatmul.f32.gmra.mxu0 %v1743
      %v1955 = vpop.f32.mrf.mxu0
      %v1956 = vadd.f32 %v1730, %v1955
      %1957 = vmatmul.f32.gmra.mxu0 %v1746
      %v1958 = vpop.f32.mrf.mxu0
      %v1959 = vadd.f32 %v1730, %v1958
      %1960 = vmatmul.f32.gmra.mxu0 %v1749
      %v1961 = vpop.f32.mrf.mxu0
      %v1962 = vadd.f32 %v1730, %v1961
      %1963 = vmatmul.f32.gmra.mxu0 %v1752
      %v1964 = vpop.f32.mrf.mxu0
      %v1965 = vadd.f32 %v1730, %v1964
      %1966 = vmatmul.f32.gmra.mxu0 %v1755
      %v1967 = vpop.f32.mrf.mxu0
      %v1968 = vadd.f32 %v1730, %v1967
      %1969 = vmatmul.f32.gmra.mxu0 %v1758
      %v1970 = vpop.f32.mrf.mxu0
      %v1971 = vadd.f32 %v1730, %v1970
      %1972 = vmatmul.f32.gmra.mxu0 %v1761
      %v1973 = vpop.f32.mrf.mxu0
      %v1974 = vadd.f32 %v1730, %v1973
      %1975 = vmatmul.f32.gmra.mxu0 %v1764
      %v1976 = vpop.f32.mrf.mxu0
      %v1977 = vadd.f32 %v1730, %v1976
      %1978 = vmatmul.f32.gmra.mxu0 %v1767
      %v1979 = vpop.f32.mrf.mxu0
      %v1980 = vadd.f32 %v1730, %v1979
      %1981 = vmatmul.f32.gmra.mxu0 %v1770
      %v1982 = vpop.f32.mrf.mxu0
      %v1983 = vadd.f32 %v1730, %v1982
      %1984 = vmatmul.f32.gmra.mxu0 %v1773
      %v1985 = vpop.f32.mrf.mxu0
      %v1986 = vadd.f32 %v1730, %v1985
      %1987 = vmatmul.f32.gmra.mxu0 %v1776
      %v1988 = vpop.f32.mrf.mxu0
      %v1989 = vadd.f32 %v1730, %v1988
      %1990 = vmatmul.f32.gmra.mxu0 %v1779
      %v1991 = vpop.f32.mrf.mxu0
      %v1992 = vadd.f32 %v1730, %v1991
      %1993 = vmatmul.f32.gmra.mxu0 %v1782
      %v1994 = vpop.f32.mrf.mxu0
      %v1995 = vadd.f32 %v1730, %v1994
      %1996 = vmatmul.f32.gmra.mxu0 %v1785
      %v1997 = vpop.f32.mrf.mxu0
      %v1998 = vadd.f32 %v1730, %v1997
      %1999 = vmatmul.f32.gmra.mxu0 %v1788
      %v2000 = vpop.f32.mrf.mxu0
      %v2001 = vadd.f32 %v1730, %v2000
      %2002 = vmatmul.f32.gmra.mxu0 %v1791
      %v2003 = vpop.f32.mrf.mxu0
      %v2004 = vadd.f32 %v1730, %v2003
      %2005 = vmatmul.f32.gmra.mxu0 %v1794
      %v2006 = vpop.f32.mrf.mxu0
      %v2007 = vadd.f32 %v1730, %v2006
      %2008 = vmatmul.f32.gmra.mxu0 %v1797
      %v2009 = vpop.f32.mrf.mxu0
      %v2010 = vadd.f32 %v1730, %v2009
      %2011 = vmatmul.f32.gmra.mxu0 %v1800
      %v2012 = vpop.f32.mrf.mxu0
      %v2013 = vadd.f32 %v1730, %v2012
      %2014 = vmatmul.f32.gmra.mxu0 %v1803
      %v2015 = vpop.f32.mrf.mxu0
      %v2016 = vadd.f32 %v1730, %v2015
      %2017 = vmatmul.f32.gmra.mxu0 %v1806
      %v2018 = vpop.f32.mrf.mxu0
      %v2019 = vadd.f32 %v1730, %v2018
      %2020 = vmatmul.f32.gmra.mxu0 %v1809
      %v2021 = vpop.f32.mrf.mxu0
      %v2022 = vadd.f32 %v1730, %v2021
      %2023 = vmatmul.f32.gmra.mxu0 %v1812
      %v2024 = vpop.f32.mrf.mxu0
      %v2025 = vadd.f32 %v1730, %v2024
      %2026 = vmatmul.f32.gmra.mxu0 %v1815
      %v2027 = vpop.f32.mrf.mxu0
      %v2028 = vadd.f32 %v1730, %v2027
      %2029 = vmatmul.f32.gmra.mxu0 %v1818
      %v2030 = vpop.f32.mrf.mxu0
      %v2031 = vadd.f32 %v1730, %v2030
      %2032 = vmatmul.f32.gmra.mxu0 %v1821
      %v2033 = vpop.f32.mrf.mxu0
      %v2034 = vadd.f32 %v1730, %v2033
      %2035 = vmatmul.f32.gmra.mxu0 %v1824
      %v2036 = vpop.f32.mrf.mxu0
      %v2037 = vadd.f32 %v1730, %v2036
      %2038 = vmatmul.f32.gmra.mxu0 %v1827
      %v2039 = vpop.f32.mrf.mxu0
      %v2040 = vadd.f32 %v1730, %v2039
      %2041 = vmatmul.f32.gmra.mxu0 %v1830
      %v2042 = vpop.f32.mrf.mxu0
      %v2043 = vadd.f32 %v1730, %v2042
      %2044 = vmatmul.f32.gmra.mxu0 %v1833
      %v2045 = vpop.f32.mrf.mxu0
      %v2046 = vadd.f32 %v1730, %v2045
      %2047 = vmatmul.f32.gmra.mxu0 %v1836
      %v2048 = vpop.f32.mrf.mxu0
      %v2049 = vadd.f32 %v1730, %v2048
      %2050 = vmatmul.f32.gmra.mxu0 %v1839
      %v2051 = vpop.f32.mrf.mxu0
      %v2052 = vadd.f32 %v1730, %v2051
      %2053 = vmatmul.f32.gmra.mxu0 %v1842
      %v2054 = vpop.f32.mrf.mxu0
      %v2055 = vadd.f32 %v1730, %v2054
      %2056 = vmatmul.f32.gmra.mxu0 %v1845
      %v2057 = vpop.f32.mrf.mxu0
      %v2058 = vadd.f32 %v1730, %v2057
      %2059 = vmatmul.f32.gmra.mxu0 %v1848
      %v2060 = vpop.f32.mrf.mxu0
      %v2061 = vadd.f32 %v1730, %v2060
      %2062 = vmatmul.f32.gmra.mxu0 %v1851
      %v2063 = vpop.f32.mrf.mxu0
      %v2064 = vadd.f32 %v1730, %v2063
      %2065 = vmatmul.f32.gmra.mxu0 %v1854
      %v2066 = vpop.f32.mrf.mxu0
      %v2067 = vadd.f32 %v1730, %v2066
      %2068 = vmatmul.f32.gmra.mxu0 %v1857
      %v2069 = vpop.f32.mrf.mxu0
      %v2070 = vadd.f32 %v1730, %v2069
      %2071 = vmatmul.f32.gmra.mxu0 %v1860
      %v2072 = vpop.f32.mrf.mxu0
      %v2073 = vadd.f32 %v1730, %v2072
      %2074 = vmatmul.f32.gmra.mxu0 %v1863
      %v2075 = vpop.f32.mrf.mxu0
      %v2076 = vadd.f32 %v1730, %v2075
      %2077 = vmatmul.f32.gmra.mxu0 %v1866
      %v2078 = vpop.f32.mrf.mxu0
      %v2079 = vadd.f32 %v1730, %v2078
      %2080 = vmatmul.f32.gmra.mxu0 %v1869
      %v2081 = vpop.f32.mrf.mxu0
      %v2082 = vadd.f32 %v1730, %v2081
      %2083 = vmatmul.f32.gmra.mxu0 %v1872
      %v2084 = vpop.f32.mrf.mxu0
      %v2085 = vadd.f32 %v1730, %v2084
      %2086 = vmatmul.f32.gmra.mxu0 %v1875
      %v2087 = vpop.f32.mrf.mxu0
      %v2088 = vadd.f32 %v1730, %v2087
      %2089 = vmatmul.f32.gmra.mxu0 %v1878
      %v2090 = vpop.f32.mrf.mxu0
      %v2091 = vadd.f32 %v1730, %v2090
      %2092 = vmatmul.f32.gmra.mxu0 %v1881
      %v2093 = vpop.f32.mrf.mxu0
      %v2094 = vadd.f32 %v1730, %v2093
      %2095 = vmatmul.f32.gmra.mxu0 %v1884
      %v2096 = vpop.f32.mrf.mxu0
      %v2097 = vadd.f32 %v1730, %v2096
      %2098 = vmatmul.f32.gmra.mxu0 %v1887
      %v2099 = vpop.f32.mrf.mxu0
      %v2100 = vadd.f32 %v1730, %v2099
      %2101 = vmatmul.f32.gmra.mxu0 %v1890
      %v2102 = vpop.f32.mrf.mxu0
      %v2103 = vadd.f32 %v1730, %v2102
      %2104 = vmatmul.f32.gmra.mxu0 %v1893
      %v2105 = vpop.f32.mrf.mxu0
      %v2106 = vadd.f32 %v1730, %v2105
      %2107 = vmatmul.f32.gmra.mxu0 %v1896
      %v2108 = vpop.f32.mrf.mxu0
      %v2109 = vadd.f32 %v1730, %v2108
      %2110 = vmatmul.f32.gmra.mxu0 %v1899
      %v2111 = vpop.f32.mrf.mxu0
      %v2112 = vadd.f32 %v1730, %v2111
      %2113 = vmatmul.f32.gmra.mxu0 %v1902
      %v2114 = vpop.f32.mrf.mxu0
      %v2115 = vadd.f32 %v1730, %v2114
      %2116 = vmatmul.f32.gmra.mxu0 %v1905
      %v2117 = vpop.f32.mrf.mxu0
      %v2118 = vadd.f32 %v1730, %v2117
      %2119 = vmatmul.f32.gmra.mxu0 %v1908
      %v2120 = vpop.f32.mrf.mxu0
      %v2121 = vadd.f32 %v1730, %v2120
      %2122 = vmatmul.f32.gmra.mxu0 %v1911
      %v2123 = vpop.f32.mrf.mxu0
      %v2124 = vadd.f32 %v1730, %v2123
      %2125 = vmatmul.f32.gmra.mxu0 %v1914
      %v2126 = vpop.f32.mrf.mxu0
      %v2127 = vadd.f32 %v1730, %v2126
      %2128 = vmatmul.f32.gmra.mxu0 %v1917
      %v2129 = vpop.f32.mrf.mxu0
      %v2130 = vadd.f32 %v1730, %v2129
      %2131 = vmatmul.f32.gmra.mxu0 %v1920
      %v2132 = vpop.f32.mrf.mxu0
      %v2133 = vadd.f32 %v1730, %v2132
      %2134 = vmatmul.f32.gmra.mxu0 %v1923
      %v2135 = vpop.f32.mrf.mxu0
      %v2136 = vadd.f32 %v1730, %v2135
      %2137 = vdwg.mxu0
      %vm2138 = vcmask 31744
      %2139 = vst.msk [vmem:[%s280] sm:$0xff] %vm2138, %v1947
      %2140 = vst.msk [vmem:[%s280 + $0x8] sm:$0xff] %vm2138, %v1950
      %2141 = vst.msk [vmem:[%s280 + $0x10] sm:$0xff] %vm2138, %v1953
      %2142 = vst.msk [vmem:[%s280 + $0x18] sm:$0xff] %vm2138, %v1956
      %2143 = vst.msk [vmem:[%s280 + $0x20] sm:$0xff] %vm2138, %v1959
      %2144 = vst.msk [vmem:[%s280 + $0x28] sm:$0xff] %vm2138, %v1962
      %2145 = vst.msk [vmem:[%s280 + $0x30] sm:$0xff] %vm2138, %v1965
      %2146 = vst.msk [vmem:[%s280 + $0x38] sm:$0xff] %vm2138, %v1968
      %2147 = vst.msk [vmem:[%s280 + $0x40] sm:$0xff] %vm2138, %v1971
      %2148 = vst.msk [vmem:[%s280 + $0x48] sm:$0xff] %vm2138, %v1974
      %2149 = vst.msk [vmem:[%s280 + $0x50] sm:$0xff] %vm2138, %v1977
      %2150 = vst.msk [vmem:[%s280 + $0x58] sm:$0xff] %vm2138, %v1980
      %2151 = vst.msk [vmem:[%s280 + $0x60] sm:$0xff] %vm2138, %v1983
      %2152 = vst.msk [vmem:[%s280 + $0x68] sm:$0xff] %vm2138, %v1986
      %2153 = vst.msk [vmem:[%s280 + $0x70] sm:$0xff] %vm2138, %v1989
      %2154 = vst.msk [vmem:[%s280 + $0x78] sm:$0xff] %vm2138, %v1992
      %2155 = vst.msk [vmem:[%s280 + $0x80] sm:$0xff] %vm2138, %v1995
      %2156 = vst.msk [vmem:[%s280 + $0x88] sm:$0xff] %vm2138, %v1998
      %2157 = vst.msk [vmem:[%s280 + $0x90] sm:$0xff] %vm2138, %v2001
      %2158 = vst.msk [vmem:[%s280 + $0x98] sm:$0xff] %vm2138, %v2004
      %2159 = vst.msk [vmem:[%s280 + $0xa0] sm:$0xff] %vm2138, %v2007
      %2160 = vst.msk [vmem:[%s280 + $0xa8] sm:$0xff] %vm2138, %v2010
      %2161 = vst.msk [vmem:[%s280 + $0xb0] sm:$0xff] %vm2138, %v2013
      %2162 = vst.msk [vmem:[%s280 + $0xb8] sm:$0xff] %vm2138, %v2016
      %2163 = vst.msk [vmem:[%s280 + $0xc0] sm:$0xff] %vm2138, %v2019
      %2164 = vst.msk [vmem:[%s280 + $0xc8] sm:$0xff] %vm2138, %v2022
      %2165 = vst.msk [vmem:[%s280 + $0xd0] sm:$0xff] %vm2138, %v2025
      %2166 = vst.msk [vmem:[%s280 + $0xd8] sm:$0xff] %vm2138, %v2028
      %2167 = vst.msk [vmem:[%s280 + $0xe0] sm:$0xff] %vm2138, %v2031
      %2168 = vst.msk [vmem:[%s280 + $0xe8] sm:$0xff] %vm2138, %v2034
      %2169 = vst.msk [vmem:[%s280 + $0xf0] sm:$0xff] %vm2138, %v2037
      %2170 = vst.msk [vmem:[%s280 + $0xf8] sm:$0xff] %vm2138, %v2040
      %2171 = vst.msk [vmem:[%s280 + $0x100] sm:$0xff] %vm2138, %v2043
      %2172 = vst.msk [vmem:[%s280 + $0x108] sm:$0xff] %vm2138, %v2046
      %2173 = vst.msk [vmem:[%s280 + $0x110] sm:$0xff] %vm2138, %v2049
      %2174 = vst.msk [vmem:[%s280 + $0x118] sm:$0xff] %vm2138, %v2052
      %2175 = vst.msk [vmem:[%s280 + $0x120] sm:$0xff] %vm2138, %v2055
      %2176 = vst.msk [vmem:[%s280 + $0x128] sm:$0xff] %vm2138, %v2058
      %2177 = vst.msk [vmem:[%s280 + $0x130] sm:$0xff] %vm2138, %v2061
      %2178 = vst.msk [vmem:[%s280 + $0x138] sm:$0xff] %vm2138, %v2064
      %2179 = vst.msk [vmem:[%s280 + $0x140] sm:$0xff] %vm2138, %v2067
      %2180 = vst.msk [vmem:[%s280 + $0x148] sm:$0xff] %vm2138, %v2070
      %2181 = vst.msk [vmem:[%s280 + $0x150] sm:$0xff] %vm2138, %v2073
      %2182 = vst.msk [vmem:[%s280 + $0x158] sm:$0xff] %vm2138, %v2076
      %2183 = vst.msk [vmem:[%s280 + $0x160] sm:$0xff] %vm2138, %v2079
      %2184 = vst.msk [vmem:[%s280 + $0x168] sm:$0xff] %vm2138, %v2082
      %2185 = vst.msk [vmem:[%s280 + $0x170] sm:$0xff] %vm2138, %v2085
      %2186 = vst.msk [vmem:[%s280 + $0x178] sm:$0xff] %vm2138, %v2088
      %2187 = vst.msk [vmem:[%s280 + $0x180] sm:$0xff] %vm2138, %v2091
      %2188 = vst.msk [vmem:[%s280 + $0x188] sm:$0xff] %vm2138, %v2094
      %2189 = vst.msk [vmem:[%s280 + $0x190] sm:$0xff] %vm2138, %v2097
      %2190 = vst.msk [vmem:[%s280 + $0x198] sm:$0xff] %vm2138, %v2100
      %2191 = vst.msk [vmem:[%s280 + $0x1a0] sm:$0xff] %vm2138, %v2103
      %2192 = vst.msk [vmem:[%s280 + $0x1a8] sm:$0xff] %vm2138, %v2106
      %2193 = vst.msk [vmem:[%s280 + $0x1b0] sm:$0xff] %vm2138, %v2109
      %2194 = vst.msk [vmem:[%s280 + $0x1b8] sm:$0xff] %vm2138, %v2112
      %2195 = vst.msk [vmem:[%s280 + $0x1c0] sm:$0xff] %vm2138, %v2115
      %2196 = vst.msk [vmem:[%s280 + $0x1c8] sm:$0xff] %vm2138, %v2118
      %2197 = vst.msk [vmem:[%s280 + $0x1d0] sm:$0xff] %vm2138, %v2121
      %2198 = vst.msk [vmem:[%s280 + $0x1d8] sm:$0xff] %vm2138, %v2124
      %2199 = vst.msk [vmem:[%s280 + $0x1e0] sm:$0xff] %vm2138, %v2127
      %2200 = vst.msk [vmem:[%s280 + $0x1e8] sm:$0xff] %vm2138, %v2130
      %2201 = vst.msk [vmem:[%s280 + $0x1f0] sm:$0xff] %vm2138, %v2133
      %2202 = vst.msk [vmem:[%s280 + $0x1f8] sm:$0xff] %vm2138, %v2136
      %s2203 = smul.u32 64, %s18
      %p2204 = scmp.lt.s32.totalorder %s2203, 127
      %s2205 = scalar_select %p2204, %s2203, 127
      %s2206 = smul.addr %s2205, 8
      %s2207 = scalar_lea.vmem %s7, %s2206
      // Predicated region
      $region49: #{mlp_forward.1} parent=47 // pred_check
        %p2208 = pneg %p188
      $region50: #{mlp_forward.1} parent=47 // pred_check_branch
        %2210 = sbr.rel (%p2208) target = $region52
      $region51: #{mlp_forward.1} parent=47 // pred_region
        %s2211 = smul.u32 64, %s18
      $region52: #{mlp_forward.1} parent=47 // pred_fallthru
        _
    $region48: #{mlp_forward.1} parent=5 // pred_fallthru
      _
    %p2212 = scmp.le.s32.totalorder 2, %s13
    // Predicated region
    $region53: #{mlp_forward.1} parent=5 // pred_check
      %p2213 = pneg %p2212
    $region54: #{mlp_forward.1} parent=5 // pred_check_branch
      %2215 = sbr.rel (%p2213) target = $region56
    $region55: #{mlp_forward.1} parent=5 // pred_region
      %s2216 = ssub.s32 %s13, 2
      // Predicated region
      $region57: #{mlp_forward.1} parent=55 // pred_check
        %p2217 = pneg %p194
      $region58: #{mlp_forward.1} parent=55 // pred_check_branch
        %2219 = sbr.rel (%p2217) target = $region60
      $region59: #{mlp_forward.1} parent=55 // pred_region
        %s2220 = smul.u32 64, %s19
        %p2221 = scmp.lt.s32.totalorder %s2220, 127
        %s2222 = scalar_select %p2221, %s2220, 127
        %s2223 = smul.addr %s2222, 8
        %s2224 = scalar_lea.vmem %s7, %s2223
      $region60: #{mlp_forward.1} parent=55 // pred_fallthru
        _
    $region56: #{mlp_forward.1} parent=5 // pred_fallthru
      _
  $region6: #{mlp_forward.1} parent=0 // loop_footer
    %s17 = sadd.s32 1, %s13
  $region7: #{mlp_forward.1} parent=0 // loop_footer_branch
    %12 = sbr.rel target = $region3
  $region8: #{mlp_forward.1} parent=0 // loop_exit
    _

</llo_original>
